<compile_context>
chip_gen: v5e
topology: v5e:2x2
jax: 0.10.0
libtpu: 0.0.40
codegen_flags: <defaults>
</compile_context>

<pallas_src>
import functools

import jax
import jax.numpy as jnp
from jax.experimental import pallas as pl
from jax.experimental.pallas import tpu as pltpu

ENC_DIM = 256     # enc_dim default of SiameseEncodingModel
FEAT_C = 2048     # fixed by `self.encoder.fc = nn.Linear(2048, enc_dim)`


def _head_kernel(f_ref, w_ref, b_ref, o_ref, *, normalize):
    # f_ref: [TN, S, C] (bf16/f32)   w_ref: [C, D] f32   b_ref: [1, D] f32
    # o_ref: [TN, D] f32
    f = f_ref[...].astype(jnp.float32)              # upcast: accumulate pooling in f32
    pooled = jnp.mean(f, axis=1)                    # global average pool -> [TN, C]
    enc = jnp.dot(pooled, w_ref[...],
                  preferred_element_type=jnp.float32) + b_ref[...]   # fc -> [TN, D]
    if normalize:
        sq = jnp.sum(enc * enc, axis=1, keepdims=True)   # ||enc||^2 per row
        enc = enc * jax.lax.rsqrt(sq)                    # L2 normalize (EUP rsqrt)
    o_ref[...] = enc


def _round_up(x, m):
    return (x + m - 1) // m * m


def features_from_nchw(feat_nchw):
    """Compat helper: PyTorch NCHW backbone features -> channels-last [N, S, C].

    Prefer emitting channels-last features from the backbone directly so this
    transpose never materializes an extra HBM copy of the feature map.
    """
    n, c, h, w = feat_nchw.shape
    return jnp.transpose(feat_nchw, (0, 2, 3, 1)).reshape(n, h * w, c)


def encode_head(feats_nsc, w_t, b, *, tile_n=32, feature_dtype=jnp.bfloat16,
                normalize=True):
    """avgpool + fc + (optional) L2-normalize on channels-last features [N, S, C]."""
    n, s, c = feats_nsc.shape
    assert c == FEAT_C, f"expected {FEAT_C} backbone channels, got {c}"

    f = feats_nsc.astype(feature_dtype)

    # Tile over N (sublane-aligned); pad N up so the grid divides evenly.
    # Padded (zero) rows are computed but discarded on return.
    tile_n = max(8, min(_round_up(int(tile_n), 8), _round_up(n, 8)))
    n_pad = _round_up(n, tile_n)
    if n_pad != n:
        f = jnp.pad(f, ((0, n_pad - n), (0, 0), (0, 0)))
    grid = (n_pad // tile_n,)

    itemsize = jnp.dtype(feature_dtype).itemsize
    feat_bytes = n_pad * s * c * itemsize
    w_bytes = FEAT_C * ENC_DIM * 4
    out_bytes = n_pad * ENC_DIM * 4
    cost = pl.CostEstimate(
        flops=int(2 * n_pad * FEAT_C * ENC_DIM        # fc matmul
                  + n_pad * s * FEAT_C                # pooling adds
                  + 3 * n_pad * ENC_DIM),             # bias + square + scale
        transcendentals=int(n_pad),
        bytes_accessed=int(feat_bytes + w_bytes + ENC_DIM * 4 + out_bytes),
    )

    # Double-buffered feature tile + resident weight/bias + output buffers,
    # with headroom; 32 MiB floor is safe on v5e/v6e/v7x, 48 MiB cap fits v7x.
    tile_bytes = tile_n * s * c * itemsize
    vmem_limit = 2 * tile_bytes + w_bytes + 4 * tile_n * ENC_DIM * 4 + (8 << 20)
    vmem_limit = int(min(max(vmem_limit, 32 << 20), 48 << 20))

    out = pl.pallas_call(
        functools.partial(_head_kernel, normalize=normalize),
        out_shape=jax.ShapeDtypeStruct((n_pad, ENC_DIM), jnp.float32),
        grid=grid,
        in_specs=[
            pl.BlockSpec((tile_n, s, FEAT_C), lambda i: (i, 0, 0)),   # streamed
            pl.BlockSpec((FEAT_C, ENC_DIM), lambda i: (0, 0)),        # resident
            pl.BlockSpec((1, ENC_DIM), lambda i: (0, 0)),             # resident
        ],
        out_specs=pl.BlockSpec((tile_n, ENC_DIM), lambda i: (i, 0)),
        compiler_params=pltpu.CompilerParams(
            dimension_semantics=("parallel",),
            vmem_limit_bytes=vmem_limit),
        cost_estimate=cost,
    )(f, w_t, b)
    return out[:n]


def siamese_forward(f1_nsc, f2_nsc, w_t, b, *, train_mode=True, normalize=True,
                    tile_n=32, feature_dtype=jnp.bfloat16):
    """Siamese head. Inputs are channels-last backbone features [N, H*W, 2048]."""
    if not train_mode:
        return encode_head(f1_nsc, w_t, b, tile_n=tile_n,
                           feature_dtype=feature_dtype, normalize=normalize)
    n = f1_nsc.shape[0]
    # Fuse both branches into a single pallas_call: one weight DMA, doubled MXU M.
    stacked = jnp.concatenate([f1_nsc, f2_nsc], axis=0)
    enc = encode_head(stacked, w_t, b, tile_n=tile_n,
                      feature_dtype=feature_dtype, normalize=normalize)
    return enc[:n], enc[n:]


def _reference(feats_nsc, w_t, b, feature_dtype=jnp.bfloat16):
    # plain-JAX reference with the same bf16 feature streaming for apples-to-apples
    f = feats_nsc.astype(feature_dtype).astype(jnp.float32)
    pooled = jnp.mean(f, axis=1)                          # [N, 2048]
    enc = pooled @ w_t + b                                # [N, D]
    return enc / jnp.linalg.norm(enc, axis=1, keepdims=True)


if __name__ == "__main__":
    key = jax.random.PRNGKey(0)
    k1, k2, kw, kb = jax.random.split(key, 4)

    # Small channels-last backbone feature maps (stand-in for resnext50 stage-5
    # output, already flattened to [N, H*W, 2048]).
    N, H, W = 2, 4, 4
    S = H * W
    f1 = jax.random.normal(k1, (N, S, FEAT_C), dtype=jnp.float32)
    f2 = jax.random.normal(k2, (N, S, FEAT_C), dtype=jnp.float32)

    # Deterministic init of the replaced fc: nn.Linear(2048, 256)
    # (PyTorch default: uniform(-1/sqrt(in), 1/sqrt(in))).  Stored transposed [in, out].
    bound = 1.0 / jnp.sqrt(jnp.float32(FEAT_C))
    w_t = jax.random.uniform(kw, (FEAT_C, ENC_DIM), jnp.float32, -bound, bound)
    b = jax.random.uniform(kb, (1, ENC_DIM), jnp.float32, -bound, bound)

    enc1, enc2 = siamese_forward(f1, f2, w_t, b, train_mode=True)
    enc1 = jax.block_until_ready(enc1)
    enc2 = jax.block_until_ready(enc2)

    # sanity vs. plain-JAX reference and unit-norm check
    ref1 = _reference(f1, w_t, b)
    ref2 = _reference(f2, w_t, b)
    assert enc1.shape == (N, ENC_DIM) and enc2.shape == (N, ENC_DIM)
    assert jnp.allclose(enc1, ref1, atol=2e-3, rtol=2e-3)
    assert jnp.allclose(enc2, ref2, atol=2e-3, rtol=2e-3)
    assert jnp.allclose(jnp.linalg.norm(enc1, axis=1), 1.0, atol=1e-4)
    assert jnp.allclose(jnp.linalg.norm(enc2, axis=1), 1.0, atol=1e-4)

    # eval-mode path (forward_test): single branch
    enc_test = jax.block_until_ready(siamese_forward(f1, None, w_t, b, train_mode=False))
    assert jnp.allclose(enc_test, ref1, atol=2e-3, rtol=2e-3)

    print("KERNEL_OK")
</pallas_src>

<mosaic_0001>
module attributes {stable_mosaic.version = 11 : i64} {
  func.func @_head_kernel(%arg0: i32, %arg1: memref<8x16x2048xbf16, #tpu.memory_space<vmem>>, %arg2: memref<2048x256xf32, #tpu.memory_space<vmem>>, %arg3: memref<1x256xf32, #tpu.memory_space<vmem>>, %arg4: memref<8x256xf32, #tpu.memory_space<vmem>>) attributes {dimension_semantics = [#tpu.dimension_semantics<parallel>], iteration_bounds = array<i64: 1>, scalar_prefetch = 0 : i64, scratch_operands = 0 : i64, tpu.core_type = #tpu.core_type<tc>, window_params = [{transform_indices = @transform_0, window_bounds = array<i64: 8, 16, 2048>}, {pipeline_mode = #tpu.pipeline_mode<synchronous>, transform_indices = @transform_1, window_bounds = array<i64: 2048, 256>}, {pipeline_mode = #tpu.pipeline_mode<synchronous>, transform_indices = @transform_2, window_bounds = array<i64: 1, 256>}, {transform_indices = @transform_3, window_bounds = array<i64: 8, 256>}]} {
    %c0 = arith.constant 0 : index
    %c0_0 = arith.constant 0 : index
    %c0_1 = arith.constant 0 : index
    %0 = vector.load %arg1[%c0, %c0_0, %c0_1] : memref<8x16x2048xbf16, #tpu.memory_space<vmem>>, vector<8x16x2048xbf16>
    %1 = arith.extf %0 : vector<8x16x2048xbf16> to vector<8x16x2048xf32>
    %cst = arith.constant dense<0.000000e+00> : vector<8x2048xf32>
    %2 = vector.multi_reduction <add>, %1, %cst [1] : vector<8x16x2048xf32> to vector<8x2048xf32>
    %cst_2 = arith.constant 1.600000e+01 : f32
    %3 = vector.broadcast %cst_2 : f32 to vector<8x2048xf32>
    %4 = arith.divf %2, %3 : vector<8x2048xf32>
    %c0_3 = arith.constant 0 : index
    %c0_4 = arith.constant 0 : index
    %5 = vector.load %arg2[%c0_3, %c0_4] : memref<2048x256xf32, #tpu.memory_space<vmem>>, vector<2048x256xf32>
    %cst_5 = arith.constant dense<0.000000e+00> : vector<8x256xf32>
    %6 = tpu.matmul %4, %5, %cst_5 {dimension_numbers = #tpu.dot_dimension_numbers<[1], [0], [0], [1], [0, 0, 1, 1], [], []>} : vector<8x2048xf32>, vector<2048x256xf32>, vector<8x256xf32> -> vector<8x256xf32>
    %c0_6 = arith.constant 0 : index
    %c0_7 = arith.constant 0 : index
    %7 = vector.load %arg3[%c0_6, %c0_7] : memref<1x256xf32, #tpu.memory_space<vmem>>, vector<1x256xf32>
    %8 = vector.broadcast %7 : vector<1x256xf32> to vector<8x256xf32>
    %9 = arith.addf %6, %8 : vector<8x256xf32>
    %10 = arith.mulf %9, %9 : vector<8x256xf32>
    %cst_8 = arith.constant dense<0.000000e+00> : vector<8xf32>
    %11 = vector.multi_reduction <add>, %10, %cst_8 [1] : vector<8x256xf32> to vector<8xf32>
    %12 = vector.shape_cast %11 : vector<8xf32> to vector<8x1xf32>
    %13 = math.rsqrt %12 : vector<8x1xf32>
    %14 = vector.broadcast %13 : vector<8x1xf32> to vector<8x256xf32>
    %15 = arith.mulf %9, %14 : vector<8x256xf32>
    %c0_9 = arith.constant 0 : index
    %c0_10 = arith.constant 0 : index
    %16 = vector.load %arg4[%c0_9, %c0_10] : memref<8x256xf32, #tpu.memory_space<vmem>>, vector<8x256xf32>
    tpu.vector_store %arg4[%c0_9, %c0_10], %15 {strides = array<i32>} : memref<8x256xf32, #tpu.memory_space<vmem>>, vector<8x256xf32>,
    return
  }
  func.func @transform_0(%arg0: i32) -> (i32, i32, i32) {
    %c0_i32 = arith.constant 0 : i32
    %c0_i32_0 = arith.constant 0 : i32
    %c0_i32_1 = arith.constant 0 : i32
    return %arg0, %c0_i32, %c0_i32_0 : i32, i32, i32
  }
  func.func @transform_1(%arg0: i32) -> (i32, i32) {
    %c0_i32 = arith.constant 0 : i32
    %c0_i32_0 = arith.constant 0 : i32
    %c0_i32_1 = arith.constant 0 : i32
    return %c0_i32, %c0_i32_0 : i32, i32
  }
  func.func @transform_2(%arg0: i32) -> (i32, i32) {
    %c0_i32 = arith.constant 0 : i32
    %c0_i32_0 = arith.constant 0 : i32
    %c0_i32_1 = arith.constant 0 : i32
    return %c0_i32, %c0_i32_0 : i32, i32
  }
  func.func @transform_3(%arg0: i32) -> (i32, i32) {
    %c0_i32 = arith.constant 0 : i32
    %c0_i32_0 = arith.constant 0 : i32
    return %arg0, %c0_i32 : i32, i32
  }
}

</mosaic_0001>

<llo_original>
// kernel: tpu_custom_call.1
$region0: #{tpu_custom_call.1}
  #allocation0 [shape = 'u32[]', space=smem, size = 0x4, offset = 0x4, fixed_abs, tag = 'smem constant byte address 0x4 - core index']
  #allocation1 [shape = 'u32[72,128]{1,0:T(1,128)}', space=vmem, size = 0x9000, scoped, tag = 'internal scratch']
  %s0 = inlined_call_operand.hbm [shape: bf16[8,16,2048], index: 0, kind: input, shape index: {}]
  %s1 = inlined_call_operand.hbm [shape: f32[2048,256], index: 1, kind: input, shape index: {}]
  %s2 = inlined_call_operand.hbm [shape: f32[1,256], index: 2, kind: input, shape index: {}]
  %s3 = inlined_call_operand.hbm [shape: f32[8,256], index: 3, kind: output, shape index: {}]
  %s4 = sld [smem:[#allocation0]]
  $region34: #{tpu_custom_call.1} parent=0
    _
  %s6 = ssub.s32 1, %s4
  %s7 = scalar_select 0, %s6, %s4
  $region1: #{tpu_custom_call.1} parent=0
    #allocation2 [shape = 'u8[524288]{0}', space=vmem, size = 0x80000, scoped, tag = 'input window, operand 0, single buffered']
    #allocation3 [shape = 's32[1]{0}', space=sflag, size = 0x4, scoped, tag = 'scoped memory for tpu_custom_call.1']
    #allocation4 [shape = 's32[1]{0}', space=sflag, size = 0x4, scoped, tag = 'scoped memory for tpu_custom_call.1']
    #allocation5 [shape = 'u8[2097152]{0}', space=vmem, size = 0x200000, scoped, tag = 'input window, operand 1, single buffered']
    #allocation6 [shape = 's32[1]{0}', space=sflag, size = 0x4, scoped, tag = 'scoped memory for tpu_custom_call.1']
    #allocation7 [shape = 'u8[1024]{0}', space=vmem, size = 0x400, scoped, tag = 'input window, operand 2, single buffered']
    #allocation8 [shape = 'u8[8192]{0}', space=vmem, size = 0x2000, scoped, tag = 'output window, operand 0, single buffered']
    %8 = vsyncpa [#allocation3], 0
    %9 = vsyncpa [#allocation6], 0
    %10 = vsyncpa [#allocation4], 0
    // Predicated region
    $region2: #{tpu_custom_call.1} parent=1 // pred_check
      _
    $region3: #{tpu_custom_call.1} parent=1 // pred_check_branch
      %12 = sbr.rel (0) target = $region5
    $region4: #{tpu_custom_call.1} parent=1 // pred_region
      %14 = vsyncadd [#allocation3], 0
      %s15 = sshll.u32 %s0, 4
      %s16 = int_to_ptr.hbm [resolvable:$true] %s15
      %s17 = sshll.u32 [#allocation2], 4
      %s18 = int_to_ptr.vmem [resolvable:$true] %s17
      %23 = dma.hbm_to_vmem [thread:$0]  %s16, 16384, %s18, [#allocation3], 1024, 1024, 64
    $region5: #{tpu_custom_call.1} parent=1 // pred_fallthru
      _
    // Predicated region
    $region6: #{tpu_custom_call.1} parent=1 // pred_check
      _
    $region7: #{tpu_custom_call.1} parent=1 // pred_check_branch
      %25 = sbr.rel (0) target = $region9
    $region8: #{tpu_custom_call.1} parent=1 // pred_region
      %27 = vsyncadd [#allocation6], 0
      %s28 = sshll.u32 %s1, 4
      %s29 = int_to_ptr.hbm [resolvable:$true] %s28
      %s30 = sshll.u32 [#allocation5], 4
      %s31 = int_to_ptr.vmem [resolvable:$true] %s30
      %36 = dma.hbm_to_vmem [thread:$0]  %s29, 65536, %s31, [#allocation6], 256, 256, 16
    $region9: #{tpu_custom_call.1} parent=1 // pred_fallthru
      _
    // Predicated region
    $region10: #{tpu_custom_call.1} parent=1 // pred_check
      _
    $region11: #{tpu_custom_call.1} parent=1 // pred_check_branch
      %38 = sbr.rel (0) target = $region13
    $region12: #{tpu_custom_call.1} parent=1 // pred_region
      %40 = vsyncadd [#allocation6], 0
      %s42 = sshll.u32 %s2, 4
      %s43 = int_to_ptr.hbm [resolvable:$true] %s42
      %s44 = sshll.u32 [#allocation7], 4
      %s45 = int_to_ptr.vmem [resolvable:$true] %s44
      %47 = dma.hbm_to_vmem [thread:$0]  %s43, 32, %s45, [#allocation6]
    $region13: #{tpu_custom_call.1} parent=1 // pred_fallthru
      _
    // Predicated region
    $region14: #{tpu_custom_call.1} parent=1 // pred_check
      _
    $region15: #{tpu_custom_call.1} parent=1 // pred_check_branch
      %49 = sbr.rel (0) target = $region17
    $region16: #{tpu_custom_call.1} parent=1 // pred_region
      %51 = dma.done [#allocation3], 16384
    $region17: #{tpu_custom_call.1} parent=1 // pred_fallthru
      _
    // Predicated region
    $region18: #{tpu_custom_call.1} parent=1 // pred_check
      _
    $region19: #{tpu_custom_call.1} parent=1 // pred_check_branch
      %53 = sbr.rel (0) target = $region21
    $region20: #{tpu_custom_call.1} parent=1 // pred_region
      %55 = dma.done [#allocation6], 65536
    $region21: #{tpu_custom_call.1} parent=1 // pred_fallthru
      _
    // Predicated region
    $region22: #{tpu_custom_call.1} parent=1 // pred_check
      _
    $region23: #{tpu_custom_call.1} parent=1 // pred_check_branch
      %57 = sbr.rel (0) target = $region25
    $region24: #{tpu_custom_call.1} parent=1 // pred_region
      %59 = dma.done [#allocation6], 32
    $region25: #{tpu_custom_call.1} parent=1 // pred_fallthru
      _
    %v60 = vld [vmem:[#allocation2] sm:$0xff]
    %v61 = vld [vmem:[#allocation2 + $0x8] sm:$0xff]
    %v62 = vld [vmem:[#allocation2 + $0x10] sm:$0xff]
    %v63 = vld [vmem:[#allocation2 + $0x18] sm:$0xff]
    %v64 = vld [vmem:[#allocation2 + $0x20] sm:$0xff]
    %v65 = vld [vmem:[#allocation2 + $0x28] sm:$0xff]
    %v66 = vld [vmem:[#allocation2 + $0x30] sm:$0xff]
    %v67 = vld [vmem:[#allocation2 + $0x38] sm:$0xff]
    %v68 = vld [vmem:[#allocation2 + $0x40] sm:$0xff]
    %v69 = vld [vmem:[#allocation2 + $0x48] sm:$0xff]
    %v70 = vld [vmem:[#allocation2 + $0x50] sm:$0xff]
    %v71 = vld [vmem:[#allocation2 + $0x58] sm:$0xff]
    %v72 = vld [vmem:[#allocation2 + $0x60] sm:$0xff]
    %v73 = vld [vmem:[#allocation2 + $0x68] sm:$0xff]
    %v74 = vld [vmem:[#allocation2 + $0x70] sm:$0xff]
    %v75 = vld [vmem:[#allocation2 + $0x78] sm:$0xff]
    %v76 = vld [vmem:[#allocation2 + $0x80] sm:$0xff]
    %v77 = vld [vmem:[#allocation2 + $0x88] sm:$0xff]
    %v78 = vld [vmem:[#allocation2 + $0x90] sm:$0xff]
    %v79 = vld [vmem:[#allocation2 + $0x98] sm:$0xff]
    %v80 = vld [vmem:[#allocation2 + $0xa0] sm:$0xff]
    %v81 = vld [vmem:[#allocation2 + $0xa8] sm:$0xff]
    %v82 = vld [vmem:[#allocation2 + $0xb0] sm:$0xff]
    %v83 = vld [vmem:[#allocation2 + $0xb8] sm:$0xff]
    %v84 = vld [vmem:[#allocation2 + $0xc0] sm:$0xff]
    %v85 = vld [vmem:[#allocation2 + $0xc8] sm:$0xff]
    %v86 = vld [vmem:[#allocation2 + $0xd0] sm:$0xff]
    %v87 = vld [vmem:[#allocation2 + $0xd8] sm:$0xff]
    %v88 = vld [vmem:[#allocation2 + $0xe0] sm:$0xff]
    %v89 = vld [vmem:[#allocation2 + $0xe8] sm:$0xff]
    %v90 = vld [vmem:[#allocation2 + $0xf0] sm:$0xff]
    %v91 = vld [vmem:[#allocation2 + $0xf8] sm:$0xff]
    %v92 = vld [vmem:[#allocation2 + $0x100] sm:$0xff]
    %v93 = vld [vmem:[#allocation2 + $0x108] sm:$0xff]
    %v94 = vld [vmem:[#allocation2 + $0x110] sm:$0xff]
    %v95 = vld [vmem:[#allocation2 + $0x118] sm:$0xff]
    %v96 = vld [vmem:[#allocation2 + $0x120] sm:$0xff]
    %v97 = vld [vmem:[#allocation2 + $0x128] sm:$0xff]
    %v98 = vld [vmem:[#allocation2 + $0x130] sm:$0xff]
    %v99 = vld [vmem:[#allocation2 + $0x138] sm:$0xff]
    %v100 = vld [vmem:[#allocation2 + $0x140] sm:$0xff]
    %v101 = vld [vmem:[#allocation2 + $0x148] sm:$0xff]
    %v102 = vld [vmem:[#allocation2 + $0x150] sm:$0xff]
    %v103 = vld [vmem:[#allocation2 + $0x158] sm:$0xff]
    %v104 = vld [vmem:[#allocation2 + $0x160] sm:$0xff]
    %v105 = vld [vmem:[#allocation2 + $0x168] sm:$0xff]
    %v106 = vld [vmem:[#allocation2 + $0x170] sm:$0xff]
    %v107 = vld [vmem:[#allocation2 + $0x178] sm:$0xff]
    %v108 = vld [vmem:[#allocation2 + $0x180] sm:$0xff]
    %v109 = vld [vmem:[#allocation2 + $0x188] sm:$0xff]
    %v110 = vld [vmem:[#allocation2 + $0x190] sm:$0xff]
    %v111 = vld [vmem:[#allocation2 + $0x198] sm:$0xff]
    %v112 = vld [vmem:[#allocation2 + $0x1a0] sm:$0xff]
    %v113 = vld [vmem:[#allocation2 + $0x1a8] sm:$0xff]
    %v114 = vld [vmem:[#allocation2 + $0x1b0] sm:$0xff]
    %v115 = vld [vmem:[#allocation2 + $0x1b8] sm:$0xff]
    %v116 = vld [vmem:[#allocation2 + $0x1c0] sm:$0xff]
    %v117 = vld [vmem:[#allocation2 + $0x1c8] sm:$0xff]
    %v118 = vld [vmem:[#allocation2 + $0x1d0] sm:$0xff]
    %v119 = vld [vmem:[#allocation2 + $0x1d8] sm:$0xff]
    %v120 = vld [vmem:[#allocation2 + $0x1e0] sm:$0xff]
    %v121 = vld [vmem:[#allocation2 + $0x1e8] sm:$0xff]
    %v122 = vld [vmem:[#allocation2 + $0x1f0] sm:$0xff]
    %v123 = vld [vmem:[#allocation2 + $0x1f8] sm:$0xff]
    %v124 = vld [vmem:[#allocation2 + $0x200] sm:$0xff]
    %v125 = vld [vmem:[#allocation2 + $0x208] sm:$0xff]
    %v126 = vld [vmem:[#allocation2 + $0x210] sm:$0xff]
    %v127 = vld [vmem:[#allocation2 + $0x218] sm:$0xff]
    %v128 = vld [vmem:[#allocation2 + $0x220] sm:$0xff]
    %v129 = vld [vmem:[#allocation2 + $0x228] sm:$0xff]
    %v130 = vld [vmem:[#allocation2 + $0x230] sm:$0xff]
    %v131 = vld [vmem:[#allocation2 + $0x238] sm:$0xff]
    %v132 = vld [vmem:[#allocation2 + $0x240] sm:$0xff]
    %v133 = vld [vmem:[#allocation2 + $0x248] sm:$0xff]
    %v134 = vld [vmem:[#allocation2 + $0x250] sm:$0xff]
    %v135 = vld [vmem:[#allocation2 + $0x258] sm:$0xff]
    %v136 = vld [vmem:[#allocation2 + $0x260] sm:$0xff]
    %v137 = vld [vmem:[#allocation2 + $0x268] sm:$0xff]
    %v138 = vld [vmem:[#allocation2 + $0x270] sm:$0xff]
    %v139 = vld [vmem:[#allocation2 + $0x278] sm:$0xff]
    %v140 = vld [vmem:[#allocation2 + $0x280] sm:$0xff]
    %v141 = vld [vmem:[#allocation2 + $0x288] sm:$0xff]
    %v142 = vld [vmem:[#allocation2 + $0x290] sm:$0xff]
    %v143 = vld [vmem:[#allocation2 + $0x298] sm:$0xff]
    %v144 = vld [vmem:[#allocation2 + $0x2a0] sm:$0xff]
    %v145 = vld [vmem:[#allocation2 + $0x2a8] sm:$0xff]
    %v146 = vld [vmem:[#allocation2 + $0x2b0] sm:$0xff]
    %v147 = vld [vmem:[#allocation2 + $0x2b8] sm:$0xff]
    %v148 = vld [vmem:[#allocation2 + $0x2c0] sm:$0xff]
    %v149 = vld [vmem:[#allocation2 + $0x2c8] sm:$0xff]
    %v150 = vld [vmem:[#allocation2 + $0x2d0] sm:$0xff]
    %v151 = vld [vmem:[#allocation2 + $0x2d8] sm:$0xff]
    %v152 = vld [vmem:[#allocation2 + $0x2e0] sm:$0xff]
    %v153 = vld [vmem:[#allocation2 + $0x2e8] sm:$0xff]
    %v154 = vld [vmem:[#allocation2 + $0x2f0] sm:$0xff]
    %v155 = vld [vmem:[#allocation2 + $0x2f8] sm:$0xff]
    %v156 = vld [vmem:[#allocation2 + $0x300] sm:$0xff]
    %v157 = vld [vmem:[#allocation2 + $0x308] sm:$0xff]
    %v158 = vld [vmem:[#allocation2 + $0x310] sm:$0xff]
    %v159 = vld [vmem:[#allocation2 + $0x318] sm:$0xff]
    %v160 = vld [vmem:[#allocation2 + $0x320] sm:$0xff]
    %v161 = vld [vmem:[#allocation2 + $0x328] sm:$0xff]
    %v162 = vld [vmem:[#allocation2 + $0x330] sm:$0xff]
    %v163 = vld [vmem:[#allocation2 + $0x338] sm:$0xff]
    %v164 = vld [vmem:[#allocation2 + $0x340] sm:$0xff]
    %v165 = vld [vmem:[#allocation2 + $0x348] sm:$0xff]
    %v166 = vld [vmem:[#allocation2 + $0x350] sm:$0xff]
    %v167 = vld [vmem:[#allocation2 + $0x358] sm:$0xff]
    %v168 = vld [vmem:[#allocation2 + $0x360] sm:$0xff]
    %v169 = vld [vmem:[#allocation2 + $0x368] sm:$0xff]
    %v170 = vld [vmem:[#allocation2 + $0x370] sm:$0xff]
    %v171 = vld [vmem:[#allocation2 + $0x378] sm:$0xff]
    %v172 = vld [vmem:[#allocation2 + $0x380] sm:$0xff]
    %v173 = vld [vmem:[#allocation2 + $0x388] sm:$0xff]
    %v174 = vld [vmem:[#allocation2 + $0x390] sm:$0xff]
    %v175 = vld [vmem:[#allocation2 + $0x398] sm:$0xff]
    %v176 = vld [vmem:[#allocation2 + $0x3a0] sm:$0xff]
    %v177 = vld [vmem:[#allocation2 + $0x3a8] sm:$0xff]
    %v178 = vld [vmem:[#allocation2 + $0x3b0] sm:$0xff]
    %v179 = vld [vmem:[#allocation2 + $0x3b8] sm:$0xff]
    %v180 = vld [vmem:[#allocation2 + $0x3c0] sm:$0xff]
    %v181 = vld [vmem:[#allocation2 + $0x3c8] sm:$0xff]
    %v182 = vld [vmem:[#allocation2 + $0x3d0] sm:$0xff]
    %v183 = vld [vmem:[#allocation2 + $0x3d8] sm:$0xff]
    %v184 = vld [vmem:[#allocation2 + $0x3e0] sm:$0xff]
    %v185 = vld [vmem:[#allocation2 + $0x3e8] sm:$0xff]
    %v186 = vld [vmem:[#allocation2 + $0x3f0] sm:$0xff]
    %v187 = vld [vmem:[#allocation2 + $0x3f8] sm:$0xff]
    %v188 = vunpack.c.l.bf16 %v60
    %v189 = vunpack.c.h.bf16 %v60
    %v190 = vunpack.c.l.bf16 %v61
    %v191 = vunpack.c.h.bf16 %v61
    %v192 = vunpack.c.l.bf16 %v62
    %v193 = vunpack.c.h.bf16 %v62
    %v194 = vunpack.c.l.bf16 %v63
    %v195 = vunpack.c.h.bf16 %v63
    %v196 = vunpack.c.l.bf16 %v64
    %v197 = vunpack.c.h.bf16 %v64
    %v198 = vunpack.c.l.bf16 %v65
    %v199 = vunpack.c.h.bf16 %v65
    %v200 = vunpack.c.l.bf16 %v66
    %v201 = vunpack.c.h.bf16 %v66
    %v202 = vunpack.c.l.bf16 %v67
    %v203 = vunpack.c.h.bf16 %v67
    %v204 = vunpack.c.l.bf16 %v68
    %v205 = vunpack.c.h.bf16 %v68
    %v206 = vunpack.c.l.bf16 %v69
    %v207 = vunpack.c.h.bf16 %v69
    %v208 = vunpack.c.l.bf16 %v70
    %v209 = vunpack.c.h.bf16 %v70
    %v210 = vunpack.c.l.bf16 %v71
    %v211 = vunpack.c.h.bf16 %v71
    %v212 = vunpack.c.l.bf16 %v72
    %v213 = vunpack.c.h.bf16 %v72
    %v214 = vunpack.c.l.bf16 %v73
    %v215 = vunpack.c.h.bf16 %v73
    %v216 = vunpack.c.l.bf16 %v74
    %v217 = vunpack.c.h.bf16 %v74
    %v218 = vunpack.c.l.bf16 %v75
    %v219 = vunpack.c.h.bf16 %v75
    %v220 = vunpack.c.l.bf16 %v76
    %v221 = vunpack.c.h.bf16 %v76
    %v222 = vunpack.c.l.bf16 %v77
    %v223 = vunpack.c.h.bf16 %v77
    %v224 = vunpack.c.l.bf16 %v78
    %v225 = vunpack.c.h.bf16 %v78
    %v226 = vunpack.c.l.bf16 %v79
    %v227 = vunpack.c.h.bf16 %v79
    %v228 = vunpack.c.l.bf16 %v80
    %v229 = vunpack.c.h.bf16 %v80
    %v230 = vunpack.c.l.bf16 %v81
    %v231 = vunpack.c.h.bf16 %v81
    %v232 = vunpack.c.l.bf16 %v82
    %v233 = vunpack.c.h.bf16 %v82
    %v234 = vunpack.c.l.bf16 %v83
    %v235 = vunpack.c.h.bf16 %v83
    %v236 = vunpack.c.l.bf16 %v84
    %v237 = vunpack.c.h.bf16 %v84
    %v238 = vunpack.c.l.bf16 %v85
    %v239 = vunpack.c.h.bf16 %v85
    %v240 = vunpack.c.l.bf16 %v86
    %v241 = vunpack.c.h.bf16 %v86
    %v242 = vunpack.c.l.bf16 %v87
    %v243 = vunpack.c.h.bf16 %v87
    %v244 = vunpack.c.l.bf16 %v88
    %v245 = vunpack.c.h.bf16 %v88
    %v246 = vunpack.c.l.bf16 %v89
    %v247 = vunpack.c.h.bf16 %v89
    %v248 = vunpack.c.l.bf16 %v90
    %v249 = vunpack.c.h.bf16 %v90
    %v250 = vunpack.c.l.bf16 %v91
    %v251 = vunpack.c.h.bf16 %v91
    %v252 = vunpack.c.l.bf16 %v92
    %v253 = vunpack.c.h.bf16 %v92
    %v254 = vunpack.c.l.bf16 %v93
    %v255 = vunpack.c.h.bf16 %v93
    %v256 = vunpack.c.l.bf16 %v94
    %v257 = vunpack.c.h.bf16 %v94
    %v258 = vunpack.c.l.bf16 %v95
    %v259 = vunpack.c.h.bf16 %v95
    %v260 = vunpack.c.l.bf16 %v96
    %v261 = vunpack.c.h.bf16 %v96
    %v262 = vunpack.c.l.bf16 %v97
    %v263 = vunpack.c.h.bf16 %v97
    %v264 = vunpack.c.l.bf16 %v98
    %v265 = vunpack.c.h.bf16 %v98
    %v266 = vunpack.c.l.bf16 %v99
    %v267 = vunpack.c.h.bf16 %v99
    %v268 = vunpack.c.l.bf16 %v100
    %v269 = vunpack.c.h.bf16 %v100
    %v270 = vunpack.c.l.bf16 %v101
    %v271 = vunpack.c.h.bf16 %v101
    %v272 = vunpack.c.l.bf16 %v102
    %v273 = vunpack.c.h.bf16 %v102
    %v274 = vunpack.c.l.bf16 %v103
    %v275 = vunpack.c.h.bf16 %v103
    %v276 = vunpack.c.l.bf16 %v104
    %v277 = vunpack.c.h.bf16 %v104
    %v278 = vunpack.c.l.bf16 %v105
    %v279 = vunpack.c.h.bf16 %v105
    %v280 = vunpack.c.l.bf16 %v106
    %v281 = vunpack.c.h.bf16 %v106
    %v282 = vunpack.c.l.bf16 %v107
    %v283 = vunpack.c.h.bf16 %v107
    %v284 = vunpack.c.l.bf16 %v108
    %v285 = vunpack.c.h.bf16 %v108
    %v286 = vunpack.c.l.bf16 %v109
    %v287 = vunpack.c.h.bf16 %v109
    %v288 = vunpack.c.l.bf16 %v110
    %v289 = vunpack.c.h.bf16 %v110
    %v290 = vunpack.c.l.bf16 %v111
    %v291 = vunpack.c.h.bf16 %v111
    %v292 = vunpack.c.l.bf16 %v112
    %v293 = vunpack.c.h.bf16 %v112
    %v294 = vunpack.c.l.bf16 %v113
    %v295 = vunpack.c.h.bf16 %v113
    %v296 = vunpack.c.l.bf16 %v114
    %v297 = vunpack.c.h.bf16 %v114
    %v298 = vunpack.c.l.bf16 %v115
    %v299 = vunpack.c.h.bf16 %v115
    %v300 = vunpack.c.l.bf16 %v116
    %v301 = vunpack.c.h.bf16 %v116
    %v302 = vunpack.c.l.bf16 %v117
    %v303 = vunpack.c.h.bf16 %v117
    %v304 = vunpack.c.l.bf16 %v118
    %v305 = vunpack.c.h.bf16 %v118
    %v306 = vunpack.c.l.bf16 %v119
    %v307 = vunpack.c.h.bf16 %v119
    %v308 = vunpack.c.l.bf16 %v120
    %v309 = vunpack.c.h.bf16 %v120
    %v310 = vunpack.c.l.bf16 %v121
    %v311 = vunpack.c.h.bf16 %v121
    %v312 = vunpack.c.l.bf16 %v122
    %v313 = vunpack.c.h.bf16 %v122
    %v314 = vunpack.c.l.bf16 %v123
    %v315 = vunpack.c.h.bf16 %v123
    %v316 = vunpack.c.l.bf16 %v124
    %v317 = vunpack.c.h.bf16 %v124
    %v318 = vunpack.c.l.bf16 %v125
    %v319 = vunpack.c.h.bf16 %v125
    %v320 = vunpack.c.l.bf16 %v126
    %v321 = vunpack.c.h.bf16 %v126
    %v322 = vunpack.c.l.bf16 %v127
    %v323 = vunpack.c.h.bf16 %v127
    %v324 = vunpack.c.l.bf16 %v128
    %v325 = vunpack.c.h.bf16 %v128
    %v326 = vunpack.c.l.bf16 %v129
    %v327 = vunpack.c.h.bf16 %v129
    %v328 = vunpack.c.l.bf16 %v130
    %v329 = vunpack.c.h.bf16 %v130
    %v330 = vunpack.c.l.bf16 %v131
    %v331 = vunpack.c.h.bf16 %v131
    %v332 = vunpack.c.l.bf16 %v132
    %v333 = vunpack.c.h.bf16 %v132
    %v334 = vunpack.c.l.bf16 %v133
    %v335 = vunpack.c.h.bf16 %v133
    %v336 = vunpack.c.l.bf16 %v134
    %v337 = vunpack.c.h.bf16 %v134
    %v338 = vunpack.c.l.bf16 %v135
    %v339 = vunpack.c.h.bf16 %v135
    %v340 = vunpack.c.l.bf16 %v136
    %v341 = vunpack.c.h.bf16 %v136
    %v342 = vunpack.c.l.bf16 %v137
    %v343 = vunpack.c.h.bf16 %v137
    %v344 = vunpack.c.l.bf16 %v138
    %v345 = vunpack.c.h.bf16 %v138
    %v346 = vunpack.c.l.bf16 %v139
    %v347 = vunpack.c.h.bf16 %v139
    %v348 = vunpack.c.l.bf16 %v140
    %v349 = vunpack.c.h.bf16 %v140
    %v350 = vunpack.c.l.bf16 %v141
    %v351 = vunpack.c.h.bf16 %v141
    %v352 = vunpack.c.l.bf16 %v142
    %v353 = vunpack.c.h.bf16 %v142
    %v354 = vunpack.c.l.bf16 %v143
    %v355 = vunpack.c.h.bf16 %v143
    %v356 = vunpack.c.l.bf16 %v144
    %v357 = vunpack.c.h.bf16 %v144
    %v358 = vunpack.c.l.bf16 %v145
    %v359 = vunpack.c.h.bf16 %v145
    %v360 = vunpack.c.l.bf16 %v146
    %v361 = vunpack.c.h.bf16 %v146
    %v362 = vunpack.c.l.bf16 %v147
    %v363 = vunpack.c.h.bf16 %v147
    %v364 = vunpack.c.l.bf16 %v148
    %v365 = vunpack.c.h.bf16 %v148
    %v366 = vunpack.c.l.bf16 %v149
    %v367 = vunpack.c.h.bf16 %v149
    %v368 = vunpack.c.l.bf16 %v150
    %v369 = vunpack.c.h.bf16 %v150
    %v370 = vunpack.c.l.bf16 %v151
    %v371 = vunpack.c.h.bf16 %v151
    %v372 = vunpack.c.l.bf16 %v152
    %v373 = vunpack.c.h.bf16 %v152
    %v374 = vunpack.c.l.bf16 %v153
    %v375 = vunpack.c.h.bf16 %v153
    %v376 = vunpack.c.l.bf16 %v154
    %v377 = vunpack.c.h.bf16 %v154
    %v378 = vunpack.c.l.bf16 %v155
    %v379 = vunpack.c.h.bf16 %v155
    %v380 = vunpack.c.l.bf16 %v156
    %v381 = vunpack.c.h.bf16 %v156
    %v382 = vunpack.c.l.bf16 %v157
    %v383 = vunpack.c.h.bf16 %v157
    %v384 = vunpack.c.l.bf16 %v158
    %v385 = vunpack.c.h.bf16 %v158
    %v386 = vunpack.c.l.bf16 %v159
    %v387 = vunpack.c.h.bf16 %v159
    %v388 = vunpack.c.l.bf16 %v160
    %v389 = vunpack.c.h.bf16 %v160
    %v390 = vunpack.c.l.bf16 %v161
    %v391 = vunpack.c.h.bf16 %v161
    %v392 = vunpack.c.l.bf16 %v162
    %v393 = vunpack.c.h.bf16 %v162
    %v394 = vunpack.c.l.bf16 %v163
    %v395 = vunpack.c.h.bf16 %v163
    %v396 = vunpack.c.l.bf16 %v164
    %v397 = vunpack.c.h.bf16 %v164
    %v398 = vunpack.c.l.bf16 %v165
    %v399 = vunpack.c.h.bf16 %v165
    %v400 = vunpack.c.l.bf16 %v166
    %v401 = vunpack.c.h.bf16 %v166
    %v402 = vunpack.c.l.bf16 %v167
    %v403 = vunpack.c.h.bf16 %v167
    %v404 = vunpack.c.l.bf16 %v168
    %v405 = vunpack.c.h.bf16 %v168
    %v406 = vunpack.c.l.bf16 %v169
    %v407 = vunpack.c.h.bf16 %v169
    %v408 = vunpack.c.l.bf16 %v170
    %v409 = vunpack.c.h.bf16 %v170
    %v410 = vunpack.c.l.bf16 %v171
    %v411 = vunpack.c.h.bf16 %v171
    %v412 = vunpack.c.l.bf16 %v172
    %v413 = vunpack.c.h.bf16 %v172
    %v414 = vunpack.c.l.bf16 %v173
    %v415 = vunpack.c.h.bf16 %v173
    %v416 = vunpack.c.l.bf16 %v174
    %v417 = vunpack.c.h.bf16 %v174
    %v418 = vunpack.c.l.bf16 %v175
    %v419 = vunpack.c.h.bf16 %v175
    %v420 = vunpack.c.l.bf16 %v176
    %v421 = vunpack.c.h.bf16 %v176
    %v422 = vunpack.c.l.bf16 %v177
    %v423 = vunpack.c.h.bf16 %v177
    %v424 = vunpack.c.l.bf16 %v178
    %v425 = vunpack.c.h.bf16 %v178
    %v426 = vunpack.c.l.bf16 %v179
    %v427 = vunpack.c.h.bf16 %v179
    %v428 = vunpack.c.l.bf16 %v180
    %v429 = vunpack.c.h.bf16 %v180
    %v430 = vunpack.c.l.bf16 %v181
    %v431 = vunpack.c.h.bf16 %v181
    %v432 = vunpack.c.l.bf16 %v182
    %v433 = vunpack.c.h.bf16 %v182
    %v434 = vunpack.c.l.bf16 %v183
    %v435 = vunpack.c.h.bf16 %v183
    %v436 = vunpack.c.l.bf16 %v184
    %v437 = vunpack.c.h.bf16 %v184
    %v438 = vunpack.c.l.bf16 %v185
    %v439 = vunpack.c.h.bf16 %v185
    %v440 = vunpack.c.l.bf16 %v186
    %v441 = vunpack.c.h.bf16 %v186
    %v442 = vunpack.c.l.bf16 %v187
    %v443 = vunpack.c.h.bf16 %v187
    %v444 = vadd.f32 %v188, %v204
    %v445 = vrot.slane %v444, 4
    %v446 = vadd.f32 %v444, %v445
    %v447 = vrot.slane %v446, 2
    %v448 = vadd.f32 %v446, %v447
    %v449 = vrot.slane %v448, 1
    %v450 = vadd.f32 %v448, %v449
    %v451 = vadd.f32 %v189, %v205
    %v452 = vrot.slane %v451, 4
    %v453 = vadd.f32 %v451, %v452
    %v454 = vrot.slane %v453, 2
    %v455 = vadd.f32 %v453, %v454
    %v456 = vrot.slane %v455, 1
    %v457 = vadd.f32 %v455, %v456
    %v458 = vadd.f32 %v190, %v206
    %v459 = vrot.slane %v458, 4
    %v460 = vadd.f32 %v458, %v459
    %v461 = vrot.slane %v460, 2
    %v462 = vadd.f32 %v460, %v461
    %v463 = vrot.slane %v462, 1
    %v464 = vadd.f32 %v462, %v463
    %v465 = vadd.f32 %v191, %v207
    %v466 = vrot.slane %v465, 4
    %v467 = vadd.f32 %v465, %v466
    %v468 = vrot.slane %v467, 2
    %v469 = vadd.f32 %v467, %v468
    %v470 = vrot.slane %v469, 1
    %v471 = vadd.f32 %v469, %v470
    %v472 = vadd.f32 %v192, %v208
    %v473 = vrot.slane %v472, 4
    %v474 = vadd.f32 %v472, %v473
    %v475 = vrot.slane %v474, 2
    %v476 = vadd.f32 %v474, %v475
    %v477 = vrot.slane %v476, 1
    %v478 = vadd.f32 %v476, %v477
    %v479 = vadd.f32 %v193, %v209
    %v480 = vrot.slane %v479, 4
    %v481 = vadd.f32 %v479, %v480
    %v482 = vrot.slane %v481, 2
    %v483 = vadd.f32 %v481, %v482
    %v484 = vrot.slane %v483, 1
    %v485 = vadd.f32 %v483, %v484
    %v486 = vadd.f32 %v194, %v210
    %v487 = vrot.slane %v486, 4
    %v488 = vadd.f32 %v486, %v487
    %v489 = vrot.slane %v488, 2
    %v490 = vadd.f32 %v488, %v489
    %v491 = vrot.slane %v490, 1
    %v492 = vadd.f32 %v490, %v491
    %v493 = vadd.f32 %v195, %v211
    %v494 = vrot.slane %v493, 4
    %v495 = vadd.f32 %v493, %v494
    %v496 = vrot.slane %v495, 2
    %v497 = vadd.f32 %v495, %v496
    %v498 = vrot.slane %v497, 1
    %v499 = vadd.f32 %v497, %v498
    %v500 = vadd.f32 %v196, %v212
    %v501 = vrot.slane %v500, 4
    %v502 = vadd.f32 %v500, %v501
    %v503 = vrot.slane %v502, 2
    %v504 = vadd.f32 %v502, %v503
    %v505 = vrot.slane %v504, 1
    %v506 = vadd.f32 %v504, %v505
    %v507 = vadd.f32 %v197, %v213
    %v508 = vrot.slane %v507, 4
    %v509 = vadd.f32 %v507, %v508
    %v510 = vrot.slane %v509, 2
    %v511 = vadd.f32 %v509, %v510
    %v512 = vrot.slane %v511, 1
    %v513 = vadd.f32 %v511, %v512
    %v514 = vadd.f32 %v198, %v214
    %v515 = vrot.slane %v514, 4
    %v516 = vadd.f32 %v514, %v515
    %v517 = vrot.slane %v516, 2
    %v518 = vadd.f32 %v516, %v517
    %v519 = vrot.slane %v518, 1
    %v520 = vadd.f32 %v518, %v519
    %v521 = vadd.f32 %v199, %v215
    %v522 = vrot.slane %v521, 4
    %v523 = vadd.f32 %v521, %v522
    %v524 = vrot.slane %v523, 2
    %v525 = vadd.f32 %v523, %v524
    %v526 = vrot.slane %v525, 1
    %v527 = vadd.f32 %v525, %v526
    %v528 = vadd.f32 %v200, %v216
    %v529 = vrot.slane %v528, 4
    %v530 = vadd.f32 %v528, %v529
    %v531 = vrot.slane %v530, 2
    %v532 = vadd.f32 %v530, %v531
    %v533 = vrot.slane %v532, 1
    %v534 = vadd.f32 %v532, %v533
    %v535 = vadd.f32 %v201, %v217
    %v536 = vrot.slane %v535, 4
    %v537 = vadd.f32 %v535, %v536
    %v538 = vrot.slane %v537, 2
    %v539 = vadd.f32 %v537, %v538
    %v540 = vrot.slane %v539, 1
    %v541 = vadd.f32 %v539, %v540
    %v542 = vadd.f32 %v202, %v218
    %v543 = vrot.slane %v542, 4
    %v544 = vadd.f32 %v542, %v543
    %v545 = vrot.slane %v544, 2
    %v546 = vadd.f32 %v544, %v545
    %v547 = vrot.slane %v546, 1
    %v548 = vadd.f32 %v546, %v547
    %v549 = vadd.f32 %v203, %v219
    %v550 = vrot.slane %v549, 4
    %v551 = vadd.f32 %v549, %v550
    %v552 = vrot.slane %v551, 2
    %v553 = vadd.f32 %v551, %v552
    %v554 = vrot.slane %v553, 1
    %v555 = vadd.f32 %v553, %v554
    %v556 = vadd.f32 %v220, %v236
    %v557 = vrot.slane %v556, 4
    %v558 = vadd.f32 %v556, %v557
    %v559 = vrot.slane %v558, 2
    %v560 = vadd.f32 %v558, %v559
    %v561 = vrot.slane %v560, 1
    %v562 = vadd.f32 %v560, %v561
    %v563 = vadd.f32 %v221, %v237
    %v564 = vrot.slane %v563, 4
    %v565 = vadd.f32 %v563, %v564
    %v566 = vrot.slane %v565, 2
    %v567 = vadd.f32 %v565, %v566
    %v568 = vrot.slane %v567, 1
    %v569 = vadd.f32 %v567, %v568
    %v570 = vadd.f32 %v222, %v238
    %v571 = vrot.slane %v570, 4
    %v572 = vadd.f32 %v570, %v571
    %v573 = vrot.slane %v572, 2
    %v574 = vadd.f32 %v572, %v573
    %v575 = vrot.slane %v574, 1
    %v576 = vadd.f32 %v574, %v575
    %v577 = vadd.f32 %v223, %v239
    %v578 = vrot.slane %v577, 4
    %v579 = vadd.f32 %v577, %v578
    %v580 = vrot.slane %v579, 2
    %v581 = vadd.f32 %v579, %v580
    %v582 = vrot.slane %v581, 1
    %v583 = vadd.f32 %v581, %v582
    %v584 = vadd.f32 %v224, %v240
    %v585 = vrot.slane %v584, 4
    %v586 = vadd.f32 %v584, %v585
    %v587 = vrot.slane %v586, 2
    %v588 = vadd.f32 %v586, %v587
    %v589 = vrot.slane %v588, 1
    %v590 = vadd.f32 %v588, %v589
    %v591 = vadd.f32 %v225, %v241
    %v592 = vrot.slane %v591, 4
    %v593 = vadd.f32 %v591, %v592
    %v594 = vrot.slane %v593, 2
    %v595 = vadd.f32 %v593, %v594
    %v596 = vrot.slane %v595, 1
    %v597 = vadd.f32 %v595, %v596
    %v598 = vadd.f32 %v226, %v242
    %v599 = vrot.slane %v598, 4
    %v600 = vadd.f32 %v598, %v599
    %v601 = vrot.slane %v600, 2
    %v602 = vadd.f32 %v600, %v601
    %v603 = vrot.slane %v602, 1
    %v604 = vadd.f32 %v602, %v603
    %v605 = vadd.f32 %v227, %v243
    %v606 = vrot.slane %v605, 4
    %v607 = vadd.f32 %v605, %v606
    %v608 = vrot.slane %v607, 2
    %v609 = vadd.f32 %v607, %v608
    %v610 = vrot.slane %v609, 1
    %v611 = vadd.f32 %v609, %v610
    %v612 = vadd.f32 %v228, %v244
    %v613 = vrot.slane %v612, 4
    %v614 = vadd.f32 %v612, %v613
    %v615 = vrot.slane %v614, 2
    %v616 = vadd.f32 %v614, %v615
    %v617 = vrot.slane %v616, 1
    %v618 = vadd.f32 %v616, %v617
    %v619 = vadd.f32 %v229, %v245
    %v620 = vrot.slane %v619, 4
    %v621 = vadd.f32 %v619, %v620
    %v622 = vrot.slane %v621, 2
    %v623 = vadd.f32 %v621, %v622
    %v624 = vrot.slane %v623, 1
    %v625 = vadd.f32 %v623, %v624
    %v626 = vadd.f32 %v230, %v246
    %v627 = vrot.slane %v626, 4
    %v628 = vadd.f32 %v626, %v627
    %v629 = vrot.slane %v628, 2
    %v630 = vadd.f32 %v628, %v629
    %v631 = vrot.slane %v630, 1
    %v632 = vadd.f32 %v630, %v631
    %v633 = vadd.f32 %v231, %v247
    %v634 = vrot.slane %v633, 4
    %v635 = vadd.f32 %v633, %v634
    %v636 = vrot.slane %v635, 2
    %v637 = vadd.f32 %v635, %v636
    %v638 = vrot.slane %v637, 1
    %v639 = vadd.f32 %v637, %v638
    %v640 = vadd.f32 %v232, %v248
    %v641 = vrot.slane %v640, 4
    %v642 = vadd.f32 %v640, %v641
    %v643 = vrot.slane %v642, 2
    %v644 = vadd.f32 %v642, %v643
    %v645 = vrot.slane %v644, 1
    %v646 = vadd.f32 %v644, %v645
    %v647 = vadd.f32 %v233, %v249
    %v648 = vrot.slane %v647, 4
    %v649 = vadd.f32 %v647, %v648
    %v650 = vrot.slane %v649, 2
    %v651 = vadd.f32 %v649, %v650
    %v652 = vrot.slane %v651, 1
    %v653 = vadd.f32 %v651, %v652
    %v654 = vadd.f32 %v234, %v250
    %v655 = vrot.slane %v654, 4
    %v656 = vadd.f32 %v654, %v655
    %v657 = vrot.slane %v656, 2
    %v658 = vadd.f32 %v656, %v657
    %v659 = vrot.slane %v658, 1
    %v660 = vadd.f32 %v658, %v659
    %v661 = vadd.f32 %v235, %v251
    %v662 = vrot.slane %v661, 4
    %v663 = vadd.f32 %v661, %v662
    %v664 = vrot.slane %v663, 2
    %v665 = vadd.f32 %v663, %v664
    %v666 = vrot.slane %v665, 1
    %v667 = vadd.f32 %v665, %v666
    %v668 = vadd.f32 %v252, %v268
    %v669 = vrot.slane %v668, 4
    %v670 = vadd.f32 %v668, %v669
    %v671 = vrot.slane %v670, 2
    %v672 = vadd.f32 %v670, %v671
    %v673 = vrot.slane %v672, 1
    %v674 = vadd.f32 %v672, %v673
    %v675 = vadd.f32 %v253, %v269
    %v676 = vrot.slane %v675, 4
    %v677 = vadd.f32 %v675, %v676
    %v678 = vrot.slane %v677, 2
    %v679 = vadd.f32 %v677, %v678
    %v680 = vrot.slane %v679, 1
    %v681 = vadd.f32 %v679, %v680
    %v682 = vadd.f32 %v254, %v270
    %v683 = vrot.slane %v682, 4
    %v684 = vadd.f32 %v682, %v683
    %v685 = vrot.slane %v684, 2
    %v686 = vadd.f32 %v684, %v685
    %v687 = vrot.slane %v686, 1
    %v688 = vadd.f32 %v686, %v687
    %v689 = vadd.f32 %v255, %v271
    %v690 = vrot.slane %v689, 4
    %v691 = vadd.f32 %v689, %v690
    %v692 = vrot.slane %v691, 2
    %v693 = vadd.f32 %v691, %v692
    %v694 = vrot.slane %v693, 1
    %v695 = vadd.f32 %v693, %v694
    %v696 = vadd.f32 %v256, %v272
    %v697 = vrot.slane %v696, 4
    %v698 = vadd.f32 %v696, %v697
    %v699 = vrot.slane %v698, 2
    %v700 = vadd.f32 %v698, %v699
    %v701 = vrot.slane %v700, 1
    %v702 = vadd.f32 %v700, %v701
    %v703 = vadd.f32 %v257, %v273
    %v704 = vrot.slane %v703, 4
    %v705 = vadd.f32 %v703, %v704
    %v706 = vrot.slane %v705, 2
    %v707 = vadd.f32 %v705, %v706
    %v708 = vrot.slane %v707, 1
    %v709 = vadd.f32 %v707, %v708
    %v710 = vadd.f32 %v258, %v274
    %v711 = vrot.slane %v710, 4
    %v712 = vadd.f32 %v710, %v711
    %v713 = vrot.slane %v712, 2
    %v714 = vadd.f32 %v712, %v713
    %v715 = vrot.slane %v714, 1
    %v716 = vadd.f32 %v714, %v715
    %v717 = vadd.f32 %v259, %v275
    %v718 = vrot.slane %v717, 4
    %v719 = vadd.f32 %v717, %v718
    %v720 = vrot.slane %v719, 2
    %v721 = vadd.f32 %v719, %v720
    %v722 = vrot.slane %v721, 1
    %v723 = vadd.f32 %v721, %v722
    %v724 = vadd.f32 %v260, %v276
    %v725 = vrot.slane %v724, 4
    %v726 = vadd.f32 %v724, %v725
    %v727 = vrot.slane %v726, 2
    %v728 = vadd.f32 %v726, %v727
    %v729 = vrot.slane %v728, 1
    %v730 = vadd.f32 %v728, %v729
    %v731 = vadd.f32 %v261, %v277
    %v732 = vrot.slane %v731, 4
    %v733 = vadd.f32 %v731, %v732
    %v734 = vrot.slane %v733, 2
    %v735 = vadd.f32 %v733, %v734
    %v736 = vrot.slane %v735, 1
    %v737 = vadd.f32 %v735, %v736
    %v738 = vadd.f32 %v262, %v278
    %v739 = vrot.slane %v738, 4
    %v740 = vadd.f32 %v738, %v739
    %v741 = vrot.slane %v740, 2
    %v742 = vadd.f32 %v740, %v741
    %v743 = vrot.slane %v742, 1
    %v744 = vadd.f32 %v742, %v743
    %v745 = vadd.f32 %v263, %v279
    %v746 = vrot.slane %v745, 4
    %v747 = vadd.f32 %v745, %v746
    %v748 = vrot.slane %v747, 2
    %v749 = vadd.f32 %v747, %v748
    %v750 = vrot.slane %v749, 1
    %v751 = vadd.f32 %v749, %v750
    %v752 = vadd.f32 %v264, %v280
    %v753 = vrot.slane %v752, 4
    %v754 = vadd.f32 %v752, %v753
    %v755 = vrot.slane %v754, 2
    %v756 = vadd.f32 %v754, %v755
    %v757 = vrot.slane %v756, 1
    %v758 = vadd.f32 %v756, %v757
    %v759 = vadd.f32 %v265, %v281
    %v760 = vrot.slane %v759, 4
    %v761 = vadd.f32 %v759, %v760
    %v762 = vrot.slane %v761, 2
    %v763 = vadd.f32 %v761, %v762
    %v764 = vrot.slane %v763, 1
    %v765 = vadd.f32 %v763, %v764
    %v766 = vadd.f32 %v266, %v282
    %v767 = vrot.slane %v766, 4
    %v768 = vadd.f32 %v766, %v767
    %v769 = vrot.slane %v768, 2
    %v770 = vadd.f32 %v768, %v769
    %v771 = vrot.slane %v770, 1
    %v772 = vadd.f32 %v770, %v771
    %v773 = vadd.f32 %v267, %v283
    %v774 = vrot.slane %v773, 4
    %v775 = vadd.f32 %v773, %v774
    %v776 = vrot.slane %v775, 2
    %v777 = vadd.f32 %v775, %v776
    %v778 = vrot.slane %v777, 1
    %v779 = vadd.f32 %v777, %v778
    %v780 = vadd.f32 %v284, %v300
    %v781 = vrot.slane %v780, 4
    %v782 = vadd.f32 %v780, %v781
    %v783 = vrot.slane %v782, 2
    %v784 = vadd.f32 %v782, %v783
    %v785 = vrot.slane %v784, 1
    %v786 = vadd.f32 %v784, %v785
    %v787 = vadd.f32 %v285, %v301
    %v788 = vrot.slane %v787, 4
    %v789 = vadd.f32 %v787, %v788
    %v790 = vrot.slane %v789, 2
    %v791 = vadd.f32 %v789, %v790
    %v792 = vrot.slane %v791, 1
    %v793 = vadd.f32 %v791, %v792
    %v794 = vadd.f32 %v286, %v302
    %v795 = vrot.slane %v794, 4
    %v796 = vadd.f32 %v794, %v795
    %v797 = vrot.slane %v796, 2
    %v798 = vadd.f32 %v796, %v797
    %v799 = vrot.slane %v798, 1
    %v800 = vadd.f32 %v798, %v799
    %v801 = vadd.f32 %v287, %v303
    %v802 = vrot.slane %v801, 4
    %v803 = vadd.f32 %v801, %v802
    %v804 = vrot.slane %v803, 2
    %v805 = vadd.f32 %v803, %v804
    %v806 = vrot.slane %v805, 1
    %v807 = vadd.f32 %v805, %v806
    %v808 = vadd.f32 %v288, %v304
    %v809 = vrot.slane %v808, 4
    %v810 = vadd.f32 %v808, %v809
    %v811 = vrot.slane %v810, 2
    %v812 = vadd.f32 %v810, %v811
    %v813 = vrot.slane %v812, 1
    %v814 = vadd.f32 %v812, %v813
    %v815 = vadd.f32 %v289, %v305
    %v816 = vrot.slane %v815, 4
    %v817 = vadd.f32 %v815, %v816
    %v818 = vrot.slane %v817, 2
    %v819 = vadd.f32 %v817, %v818
    %v820 = vrot.slane %v819, 1
    %v821 = vadd.f32 %v819, %v820
    %v822 = vadd.f32 %v290, %v306
    %v823 = vrot.slane %v822, 4
    %v824 = vadd.f32 %v822, %v823
    %v825 = vrot.slane %v824, 2
    %v826 = vadd.f32 %v824, %v825
    %v827 = vrot.slane %v826, 1
    %v828 = vadd.f32 %v826, %v827
    %v829 = vadd.f32 %v291, %v307
    %v830 = vrot.slane %v829, 4
    %v831 = vadd.f32 %v829, %v830
    %v832 = vrot.slane %v831, 2
    %v833 = vadd.f32 %v831, %v832
    %v834 = vrot.slane %v833, 1
    %v835 = vadd.f32 %v833, %v834
    %v836 = vadd.f32 %v292, %v308
    %v837 = vrot.slane %v836, 4
    %v838 = vadd.f32 %v836, %v837
    %v839 = vrot.slane %v838, 2
    %v840 = vadd.f32 %v838, %v839
    %v841 = vrot.slane %v840, 1
    %v842 = vadd.f32 %v840, %v841
    %v843 = vadd.f32 %v293, %v309
    %v844 = vrot.slane %v843, 4
    %v845 = vadd.f32 %v843, %v844
    %v846 = vrot.slane %v845, 2
    %v847 = vadd.f32 %v845, %v846
    %v848 = vrot.slane %v847, 1
    %v849 = vadd.f32 %v847, %v848
    %v850 = vadd.f32 %v294, %v310
    %v851 = vrot.slane %v850, 4
    %v852 = vadd.f32 %v850, %v851
    %v853 = vrot.slane %v852, 2
    %v854 = vadd.f32 %v852, %v853
    %v855 = vrot.slane %v854, 1
    %v856 = vadd.f32 %v854, %v855
    %v857 = vadd.f32 %v295, %v311
    %v858 = vrot.slane %v857, 4
    %v859 = vadd.f32 %v857, %v858
    %v860 = vrot.slane %v859, 2
    %v861 = vadd.f32 %v859, %v860
    %v862 = vrot.slane %v861, 1
    %v863 = vadd.f32 %v861, %v862
    %v864 = vadd.f32 %v296, %v312
    %v865 = vrot.slane %v864, 4
    %v866 = vadd.f32 %v864, %v865
    %v867 = vrot.slane %v866, 2
    %v868 = vadd.f32 %v866, %v867
    %v869 = vrot.slane %v868, 1
    %v870 = vadd.f32 %v868, %v869
    %v871 = vadd.f32 %v297, %v313
    %v872 = vrot.slane %v871, 4
    %v873 = vadd.f32 %v871, %v872
    %v874 = vrot.slane %v873, 2
    %v875 = vadd.f32 %v873, %v874
    %v876 = vrot.slane %v875, 1
    %v877 = vadd.f32 %v875, %v876
    %v878 = vadd.f32 %v298, %v314
    %v879 = vrot.slane %v878, 4
    %v880 = vadd.f32 %v878, %v879
    %v881 = vrot.slane %v880, 2
    %v882 = vadd.f32 %v880, %v881
    %v883 = vrot.slane %v882, 1
    %v884 = vadd.f32 %v882, %v883
    %v885 = vadd.f32 %v299, %v315
    %v886 = vrot.slane %v885, 4
    %v887 = vadd.f32 %v885, %v886
    %v888 = vrot.slane %v887, 2
    %v889 = vadd.f32 %v887, %v888
    %v890 = vrot.slane %v889, 1
    %v891 = vadd.f32 %v889, %v890
    %v892 = vadd.f32 %v316, %v332
    %v893 = vrot.slane %v892, 4
    %v894 = vadd.f32 %v892, %v893
    %v895 = vrot.slane %v894, 2
    %v896 = vadd.f32 %v894, %v895
    %v897 = vrot.slane %v896, 1
    %v898 = vadd.f32 %v896, %v897
    %v899 = vadd.f32 %v317, %v333
    %v900 = vrot.slane %v899, 4
    %v901 = vadd.f32 %v899, %v900
    %v902 = vrot.slane %v901, 2
    %v903 = vadd.f32 %v901, %v902
    %v904 = vrot.slane %v903, 1
    %v905 = vadd.f32 %v903, %v904
    %v906 = vadd.f32 %v318, %v334
    %v907 = vrot.slane %v906, 4
    %v908 = vadd.f32 %v906, %v907
    %v909 = vrot.slane %v908, 2
    %v910 = vadd.f32 %v908, %v909
    %v911 = vrot.slane %v910, 1
    %v912 = vadd.f32 %v910, %v911
    %v913 = vadd.f32 %v319, %v335
    %v914 = vrot.slane %v913, 4
    %v915 = vadd.f32 %v913, %v914
    %v916 = vrot.slane %v915, 2
    %v917 = vadd.f32 %v915, %v916
    %v918 = vrot.slane %v917, 1
    %v919 = vadd.f32 %v917, %v918
    %v920 = vadd.f32 %v320, %v336
    %v921 = vrot.slane %v920, 4
    %v922 = vadd.f32 %v920, %v921
    %v923 = vrot.slane %v922, 2
    %v924 = vadd.f32 %v922, %v923
    %v925 = vrot.slane %v924, 1
    %v926 = vadd.f32 %v924, %v925
    %v927 = vadd.f32 %v321, %v337
    %v928 = vrot.slane %v927, 4
    %v929 = vadd.f32 %v927, %v928
    %v930 = vrot.slane %v929, 2
    %v931 = vadd.f32 %v929, %v930
    %v932 = vrot.slane %v931, 1
    %v933 = vadd.f32 %v931, %v932
    %v934 = vadd.f32 %v322, %v338
    %v935 = vrot.slane %v934, 4
    %v936 = vadd.f32 %v934, %v935
    %v937 = vrot.slane %v936, 2
    %v938 = vadd.f32 %v936, %v937
    %v939 = vrot.slane %v938, 1
    %v940 = vadd.f32 %v938, %v939
    %v941 = vadd.f32 %v323, %v339
    %v942 = vrot.slane %v941, 4
    %v943 = vadd.f32 %v941, %v942
    %v944 = vrot.slane %v943, 2
    %v945 = vadd.f32 %v943, %v944
    %v946 = vrot.slane %v945, 1
    %v947 = vadd.f32 %v945, %v946
    %v948 = vadd.f32 %v324, %v340
    %v949 = vrot.slane %v948, 4
    %v950 = vadd.f32 %v948, %v949
    %v951 = vrot.slane %v950, 2
    %v952 = vadd.f32 %v950, %v951
    %v953 = vrot.slane %v952, 1
    %v954 = vadd.f32 %v952, %v953
    %v955 = vadd.f32 %v325, %v341
    %v956 = vrot.slane %v955, 4
    %v957 = vadd.f32 %v955, %v956
    %v958 = vrot.slane %v957, 2
    %v959 = vadd.f32 %v957, %v958
    %v960 = vrot.slane %v959, 1
    %v961 = vadd.f32 %v959, %v960
    %v962 = vadd.f32 %v326, %v342
    %v963 = vrot.slane %v962, 4
    %v964 = vadd.f32 %v962, %v963
    %v965 = vrot.slane %v964, 2
    %v966 = vadd.f32 %v964, %v965
    %v967 = vrot.slane %v966, 1
    %v968 = vadd.f32 %v966, %v967
    %v969 = vadd.f32 %v327, %v343
    %v970 = vrot.slane %v969, 4
    %v971 = vadd.f32 %v969, %v970
    %v972 = vrot.slane %v971, 2
    %v973 = vadd.f32 %v971, %v972
    %v974 = vrot.slane %v973, 1
    %v975 = vadd.f32 %v973, %v974
    %v976 = vadd.f32 %v328, %v344
    %v977 = vrot.slane %v976, 4
    %v978 = vadd.f32 %v976, %v977
    %v979 = vrot.slane %v978, 2
    %v980 = vadd.f32 %v978, %v979
    %v981 = vrot.slane %v980, 1
    %v982 = vadd.f32 %v980, %v981
    %v983 = vadd.f32 %v329, %v345
    %v984 = vrot.slane %v983, 4
    %v985 = vadd.f32 %v983, %v984
    %v986 = vrot.slane %v985, 2
    %v987 = vadd.f32 %v985, %v986
    %v988 = vrot.slane %v987, 1
    %v989 = vadd.f32 %v987, %v988
    %v990 = vadd.f32 %v330, %v346
    %v991 = vrot.slane %v990, 4
    %v992 = vadd.f32 %v990, %v991
    %v993 = vrot.slane %v992, 2
    %v994 = vadd.f32 %v992, %v993
    %v995 = vrot.slane %v994, 1
    %v996 = vadd.f32 %v994, %v995
    %v997 = vadd.f32 %v331, %v347
    %v998 = vrot.slane %v997, 4
    %v999 = vadd.f32 %v997, %v998
    %v1000 = vrot.slane %v999, 2
    %v1001 = vadd.f32 %v999, %v1000
    %v1002 = vrot.slane %v1001, 1
    %v1003 = vadd.f32 %v1001, %v1002
    %v1004 = vadd.f32 %v348, %v364
    %v1005 = vrot.slane %v1004, 4
    %v1006 = vadd.f32 %v1004, %v1005
    %v1007 = vrot.slane %v1006, 2
    %v1008 = vadd.f32 %v1006, %v1007
    %v1009 = vrot.slane %v1008, 1
    %v1010 = vadd.f32 %v1008, %v1009
    %v1011 = vadd.f32 %v349, %v365
    %v1012 = vrot.slane %v1011, 4
    %v1013 = vadd.f32 %v1011, %v1012
    %v1014 = vrot.slane %v1013, 2
    %v1015 = vadd.f32 %v1013, %v1014
    %v1016 = vrot.slane %v1015, 1
    %v1017 = vadd.f32 %v1015, %v1016
    %v1018 = vadd.f32 %v350, %v366
    %v1019 = vrot.slane %v1018, 4
    %v1020 = vadd.f32 %v1018, %v1019
    %v1021 = vrot.slane %v1020, 2
    %v1022 = vadd.f32 %v1020, %v1021
    %v1023 = vrot.slane %v1022, 1
    %v1024 = vadd.f32 %v1022, %v1023
    %v1025 = vadd.f32 %v351, %v367
    %v1026 = vrot.slane %v1025, 4
    %v1027 = vadd.f32 %v1025, %v1026
    %v1028 = vrot.slane %v1027, 2
    %v1029 = vadd.f32 %v1027, %v1028
    %v1030 = vrot.slane %v1029, 1
    %v1031 = vadd.f32 %v1029, %v1030
    %v1032 = vadd.f32 %v352, %v368
    %v1033 = vrot.slane %v1032, 4
    %v1034 = vadd.f32 %v1032, %v1033
    %v1035 = vrot.slane %v1034, 2
    %v1036 = vadd.f32 %v1034, %v1035
    %v1037 = vrot.slane %v1036, 1
    %v1038 = vadd.f32 %v1036, %v1037
    %v1039 = vadd.f32 %v353, %v369
    %v1040 = vrot.slane %v1039, 4
    %v1041 = vadd.f32 %v1039, %v1040
    %v1042 = vrot.slane %v1041, 2
    %v1043 = vadd.f32 %v1041, %v1042
    %v1044 = vrot.slane %v1043, 1
    %v1045 = vadd.f32 %v1043, %v1044
    %v1046 = vadd.f32 %v354, %v370
    %v1047 = vrot.slane %v1046, 4
    %v1048 = vadd.f32 %v1046, %v1047
    %v1049 = vrot.slane %v1048, 2
    %v1050 = vadd.f32 %v1048, %v1049
    %v1051 = vrot.slane %v1050, 1
    %v1052 = vadd.f32 %v1050, %v1051
    %v1053 = vadd.f32 %v355, %v371
    %v1054 = vrot.slane %v1053, 4
    %v1055 = vadd.f32 %v1053, %v1054
    %v1056 = vrot.slane %v1055, 2
    %v1057 = vadd.f32 %v1055, %v1056
    %v1058 = vrot.slane %v1057, 1
    %v1059 = vadd.f32 %v1057, %v1058
    %v1060 = vadd.f32 %v356, %v372
    %v1061 = vrot.slane %v1060, 4
    %v1062 = vadd.f32 %v1060, %v1061
    %v1063 = vrot.slane %v1062, 2
    %v1064 = vadd.f32 %v1062, %v1063
    %v1065 = vrot.slane %v1064, 1
    %v1066 = vadd.f32 %v1064, %v1065
    %v1067 = vadd.f32 %v357, %v373
    %v1068 = vrot.slane %v1067, 4
    %v1069 = vadd.f32 %v1067, %v1068
    %v1070 = vrot.slane %v1069, 2
    %v1071 = vadd.f32 %v1069, %v1070
    %v1072 = vrot.slane %v1071, 1
    %v1073 = vadd.f32 %v1071, %v1072
    %v1074 = vadd.f32 %v358, %v374
    %v1075 = vrot.slane %v1074, 4
    %v1076 = vadd.f32 %v1074, %v1075
    %v1077 = vrot.slane %v1076, 2
    %v1078 = vadd.f32 %v1076, %v1077
    %v1079 = vrot.slane %v1078, 1
    %v1080 = vadd.f32 %v1078, %v1079
    %v1081 = vadd.f32 %v359, %v375
    %v1082 = vrot.slane %v1081, 4
    %v1083 = vadd.f32 %v1081, %v1082
    %v1084 = vrot.slane %v1083, 2
    %v1085 = vadd.f32 %v1083, %v1084
    %v1086 = vrot.slane %v1085, 1
    %v1087 = vadd.f32 %v1085, %v1086
    %v1088 = vadd.f32 %v360, %v376
    %v1089 = vrot.slane %v1088, 4
    %v1090 = vadd.f32 %v1088, %v1089
    %v1091 = vrot.slane %v1090, 2
    %v1092 = vadd.f32 %v1090, %v1091
    %v1093 = vrot.slane %v1092, 1
    %v1094 = vadd.f32 %v1092, %v1093
    %v1095 = vadd.f32 %v361, %v377
    %v1096 = vrot.slane %v1095, 4
    %v1097 = vadd.f32 %v1095, %v1096
    %v1098 = vrot.slane %v1097, 2
    %v1099 = vadd.f32 %v1097, %v1098
    %v1100 = vrot.slane %v1099, 1
    %v1101 = vadd.f32 %v1099, %v1100
    %v1102 = vadd.f32 %v362, %v378
    %v1103 = vrot.slane %v1102, 4
    %v1104 = vadd.f32 %v1102, %v1103
    %v1105 = vrot.slane %v1104, 2
    %v1106 = vadd.f32 %v1104, %v1105
    %v1107 = vrot.slane %v1106, 1
    %v1108 = vadd.f32 %v1106, %v1107
    %v1109 = vadd.f32 %v363, %v379
    %v1110 = vrot.slane %v1109, 4
    %v1111 = vadd.f32 %v1109, %v1110
    %v1112 = vrot.slane %v1111, 2
    %v1113 = vadd.f32 %v1111, %v1112
    %v1114 = vrot.slane %v1113, 1
    %v1115 = vadd.f32 %v1113, %v1114
    %v1116 = vadd.f32 %v380, %v396
    %v1117 = vrot.slane %v1116, 4
    %v1118 = vadd.f32 %v1116, %v1117
    %v1119 = vrot.slane %v1118, 2
    %v1120 = vadd.f32 %v1118, %v1119
    %v1121 = vrot.slane %v1120, 1
    %v1122 = vadd.f32 %v1120, %v1121
    %v1123 = vadd.f32 %v381, %v397
    %v1124 = vrot.slane %v1123, 4
    %v1125 = vadd.f32 %v1123, %v1124
    %v1126 = vrot.slane %v1125, 2
    %v1127 = vadd.f32 %v1125, %v1126
    %v1128 = vrot.slane %v1127, 1
    %v1129 = vadd.f32 %v1127, %v1128
    %v1130 = vadd.f32 %v382, %v398
    %v1131 = vrot.slane %v1130, 4
    %v1132 = vadd.f32 %v1130, %v1131
    %v1133 = vrot.slane %v1132, 2
    %v1134 = vadd.f32 %v1132, %v1133
    %v1135 = vrot.slane %v1134, 1
    %v1136 = vadd.f32 %v1134, %v1135
    %v1137 = vadd.f32 %v383, %v399
    %v1138 = vrot.slane %v1137, 4
    %v1139 = vadd.f32 %v1137, %v1138
    %v1140 = vrot.slane %v1139, 2
    %v1141 = vadd.f32 %v1139, %v1140
    %v1142 = vrot.slane %v1141, 1
    %v1143 = vadd.f32 %v1141, %v1142
    %v1144 = vadd.f32 %v384, %v400
    %v1145 = vrot.slane %v1144, 4
    %v1146 = vadd.f32 %v1144, %v1145
    %v1147 = vrot.slane %v1146, 2
    %v1148 = vadd.f32 %v1146, %v1147
    %v1149 = vrot.slane %v1148, 1
    %v1150 = vadd.f32 %v1148, %v1149
    %v1151 = vadd.f32 %v385, %v401
    %v1152 = vrot.slane %v1151, 4
    %v1153 = vadd.f32 %v1151, %v1152
    %v1154 = vrot.slane %v1153, 2
    %v1155 = vadd.f32 %v1153, %v1154
    %v1156 = vrot.slane %v1155, 1
    %v1157 = vadd.f32 %v1155, %v1156
    %v1158 = vadd.f32 %v386, %v402
    %v1159 = vrot.slane %v1158, 4
    %v1160 = vadd.f32 %v1158, %v1159
    %v1161 = vrot.slane %v1160, 2
    %v1162 = vadd.f32 %v1160, %v1161
    %v1163 = vrot.slane %v1162, 1
    %v1164 = vadd.f32 %v1162, %v1163
    %v1165 = vadd.f32 %v387, %v403
    %v1166 = vrot.slane %v1165, 4
    %v1167 = vadd.f32 %v1165, %v1166
    %v1168 = vrot.slane %v1167, 2
    %v1169 = vadd.f32 %v1167, %v1168
    %v1170 = vrot.slane %v1169, 1
    %v1171 = vadd.f32 %v1169, %v1170
    %v1172 = vadd.f32 %v388, %v404
    %v1173 = vrot.slane %v1172, 4
    %v1174 = vadd.f32 %v1172, %v1173
    %v1175 = vrot.slane %v1174, 2
    %v1176 = vadd.f32 %v1174, %v1175
    %v1177 = vrot.slane %v1176, 1
    %v1178 = vadd.f32 %v1176, %v1177
    %v1179 = vadd.f32 %v389, %v405
    %v1180 = vrot.slane %v1179, 4
    %v1181 = vadd.f32 %v1179, %v1180
    %v1182 = vrot.slane %v1181, 2
    %v1183 = vadd.f32 %v1181, %v1182
    %v1184 = vrot.slane %v1183, 1
    %v1185 = vadd.f32 %v1183, %v1184
    %v1186 = vadd.f32 %v390, %v406
    %v1187 = vrot.slane %v1186, 4
    %v1188 = vadd.f32 %v1186, %v1187
    %v1189 = vrot.slane %v1188, 2
    %v1190 = vadd.f32 %v1188, %v1189
    %v1191 = vrot.slane %v1190, 1
    %v1192 = vadd.f32 %v1190, %v1191
    %v1193 = vadd.f32 %v391, %v407
    %v1194 = vrot.slane %v1193, 4
    %v1195 = vadd.f32 %v1193, %v1194
    %v1196 = vrot.slane %v1195, 2
    %v1197 = vadd.f32 %v1195, %v1196
    %v1198 = vrot.slane %v1197, 1
    %v1199 = vadd.f32 %v1197, %v1198
    %v1200 = vadd.f32 %v392, %v408
    %v1201 = vrot.slane %v1200, 4
    %v1202 = vadd.f32 %v1200, %v1201
    %v1203 = vrot.slane %v1202, 2
    %v1204 = vadd.f32 %v1202, %v1203
    %v1205 = vrot.slane %v1204, 1
    %v1206 = vadd.f32 %v1204, %v1205
    %v1207 = vadd.f32 %v393, %v409
    %v1208 = vrot.slane %v1207, 4
    %v1209 = vadd.f32 %v1207, %v1208
    %v1210 = vrot.slane %v1209, 2
    %v1211 = vadd.f32 %v1209, %v1210
    %v1212 = vrot.slane %v1211, 1
    %v1213 = vadd.f32 %v1211, %v1212
    %v1214 = vadd.f32 %v394, %v410
    %v1215 = vrot.slane %v1214, 4
    %v1216 = vadd.f32 %v1214, %v1215
    %v1217 = vrot.slane %v1216, 2
    %v1218 = vadd.f32 %v1216, %v1217
    %v1219 = vrot.slane %v1218, 1
    %v1220 = vadd.f32 %v1218, %v1219
    %v1221 = vadd.f32 %v395, %v411
    %v1222 = vrot.slane %v1221, 4
    %v1223 = vadd.f32 %v1221, %v1222
    %v1224 = vrot.slane %v1223, 2
    %v1225 = vadd.f32 %v1223, %v1224
    %v1226 = vrot.slane %v1225, 1
    %v1227 = vadd.f32 %v1225, %v1226
    %v1228 = vadd.f32 %v412, %v428
    %v1229 = vrot.slane %v1228, 4
    %v1230 = vadd.f32 %v1228, %v1229
    %v1231 = vrot.slane %v1230, 2
    %v1232 = vadd.f32 %v1230, %v1231
    %v1233 = vrot.slane %v1232, 1
    %v1234 = vadd.f32 %v1232, %v1233
    %v1235 = vadd.f32 %v413, %v429
    %v1236 = vrot.slane %v1235, 4
    %v1237 = vadd.f32 %v1235, %v1236
    %v1238 = vrot.slane %v1237, 2
    %v1239 = vadd.f32 %v1237, %v1238
    %v1240 = vrot.slane %v1239, 1
    %v1241 = vadd.f32 %v1239, %v1240
    %v1242 = vadd.f32 %v414, %v430
    %v1243 = vrot.slane %v1242, 4
    %v1244 = vadd.f32 %v1242, %v1243
    %v1245 = vrot.slane %v1244, 2
    %v1246 = vadd.f32 %v1244, %v1245
    %v1247 = vrot.slane %v1246, 1
    %v1248 = vadd.f32 %v1246, %v1247
    %v1249 = vadd.f32 %v415, %v431
    %v1250 = vrot.slane %v1249, 4
    %v1251 = vadd.f32 %v1249, %v1250
    %v1252 = vrot.slane %v1251, 2
    %v1253 = vadd.f32 %v1251, %v1252
    %v1254 = vrot.slane %v1253, 1
    %v1255 = vadd.f32 %v1253, %v1254
    %v1256 = vadd.f32 %v416, %v432
    %v1257 = vrot.slane %v1256, 4
    %v1258 = vadd.f32 %v1256, %v1257
    %v1259 = vrot.slane %v1258, 2
    %v1260 = vadd.f32 %v1258, %v1259
    %v1261 = vrot.slane %v1260, 1
    %v1262 = vadd.f32 %v1260, %v1261
    %v1263 = vadd.f32 %v417, %v433
    %v1264 = vrot.slane %v1263, 4
    %v1265 = vadd.f32 %v1263, %v1264
    %v1266 = vrot.slane %v1265, 2
    %v1267 = vadd.f32 %v1265, %v1266
    %v1268 = vrot.slane %v1267, 1
    %v1269 = vadd.f32 %v1267, %v1268
    %v1270 = vadd.f32 %v418, %v434
    %v1271 = vrot.slane %v1270, 4
    %v1272 = vadd.f32 %v1270, %v1271
    %v1273 = vrot.slane %v1272, 2
    %v1274 = vadd.f32 %v1272, %v1273
    %v1275 = vrot.slane %v1274, 1
    %v1276 = vadd.f32 %v1274, %v1275
    %v1277 = vadd.f32 %v419, %v435
    %v1278 = vrot.slane %v1277, 4
    %v1279 = vadd.f32 %v1277, %v1278
    %v1280 = vrot.slane %v1279, 2
    %v1281 = vadd.f32 %v1279, %v1280
    %v1282 = vrot.slane %v1281, 1
    %v1283 = vadd.f32 %v1281, %v1282
    %v1284 = vadd.f32 %v420, %v436
    %v1285 = vrot.slane %v1284, 4
    %v1286 = vadd.f32 %v1284, %v1285
    %v1287 = vrot.slane %v1286, 2
    %v1288 = vadd.f32 %v1286, %v1287
    %v1289 = vrot.slane %v1288, 1
    %v1290 = vadd.f32 %v1288, %v1289
    %v1291 = vadd.f32 %v421, %v437
    %v1292 = vrot.slane %v1291, 4
    %v1293 = vadd.f32 %v1291, %v1292
    %v1294 = vrot.slane %v1293, 2
    %v1295 = vadd.f32 %v1293, %v1294
    %v1296 = vrot.slane %v1295, 1
    %v1297 = vadd.f32 %v1295, %v1296
    %v1298 = vadd.f32 %v422, %v438
    %v1299 = vrot.slane %v1298, 4
    %v1300 = vadd.f32 %v1298, %v1299
    %v1301 = vrot.slane %v1300, 2
    %v1302 = vadd.f32 %v1300, %v1301
    %v1303 = vrot.slane %v1302, 1
    %v1304 = vadd.f32 %v1302, %v1303
    %v1305 = vadd.f32 %v423, %v439
    %v1306 = vrot.slane %v1305, 4
    %v1307 = vadd.f32 %v1305, %v1306
    %v1308 = vrot.slane %v1307, 2
    %v1309 = vadd.f32 %v1307, %v1308
    %v1310 = vrot.slane %v1309, 1
    %v1311 = vadd.f32 %v1309, %v1310
    %v1312 = vadd.f32 %v424, %v440
    %v1313 = vrot.slane %v1312, 4
    %v1314 = vadd.f32 %v1312, %v1313
    %v1315 = vrot.slane %v1314, 2
    %v1316 = vadd.f32 %v1314, %v1315
    %v1317 = vrot.slane %v1316, 1
    %v1318 = vadd.f32 %v1316, %v1317
    %v1319 = vadd.f32 %v425, %v441
    %v1320 = vrot.slane %v1319, 4
    %v1321 = vadd.f32 %v1319, %v1320
    %v1322 = vrot.slane %v1321, 2
    %v1323 = vadd.f32 %v1321, %v1322
    %v1324 = vrot.slane %v1323, 1
    %v1325 = vadd.f32 %v1323, %v1324
    %v1326 = vadd.f32 %v426, %v442
    %v1327 = vrot.slane %v1326, 4
    %v1328 = vadd.f32 %v1326, %v1327
    %v1329 = vrot.slane %v1328, 2
    %v1330 = vadd.f32 %v1328, %v1329
    %v1331 = vrot.slane %v1330, 1
    %v1332 = vadd.f32 %v1330, %v1331
    %v1333 = vadd.f32 %v427, %v443
    %v1334 = vrot.slane %v1333, 4
    %v1335 = vadd.f32 %v1333, %v1334
    %v1336 = vrot.slane %v1335, 2
    %v1337 = vadd.f32 %v1335, %v1336
    %v1338 = vrot.slane %v1337, 1
    %v1339 = vadd.f32 %v1337, %v1338
    %v1340 = vrcp.pop 16.0
    %v1341 = vmul.f32 16.0, %v1340
    %v1342 = vsub.f32 1.0, %v1341
    %v1343 = vmul.f32 %v1340, %v1342
    %v1344 = vadd.f32 %v1340, %v1343
    %vm1345 = vweird.f32 %v1340
    %v1346 = vsel %vm1345, %v1340, %v1344
    %v1347 = vmul.f32 %v450, %v1346
    %v1348 = vmul.f32 %v457, %v1346
    %v1349 = vmul.f32 %v464, %v1346
    %v1350 = vmul.f32 %v471, %v1346
    %v1351 = vmul.f32 %v478, %v1346
    %v1352 = vmul.f32 %v485, %v1346
    %v1353 = vmul.f32 %v492, %v1346
    %v1354 = vmul.f32 %v499, %v1346
    %v1355 = vmul.f32 %v506, %v1346
    %v1356 = vmul.f32 %v513, %v1346
    %v1357 = vmul.f32 %v520, %v1346
    %v1358 = vmul.f32 %v527, %v1346
    %v1359 = vmul.f32 %v534, %v1346
    %v1360 = vmul.f32 %v541, %v1346
    %v1361 = vmul.f32 %v548, %v1346
    %v1362 = vmul.f32 %v555, %v1346
    %v1363 = vmul.f32 %v562, %v1346
    %v1364 = vmul.f32 %v569, %v1346
    %v1365 = vmul.f32 %v576, %v1346
    %v1366 = vmul.f32 %v583, %v1346
    %v1367 = vmul.f32 %v590, %v1346
    %v1368 = vmul.f32 %v597, %v1346
    %v1369 = vmul.f32 %v604, %v1346
    %v1370 = vmul.f32 %v611, %v1346
    %v1371 = vmul.f32 %v618, %v1346
    %v1372 = vmul.f32 %v625, %v1346
    %v1373 = vmul.f32 %v632, %v1346
    %v1374 = vmul.f32 %v639, %v1346
    %v1375 = vmul.f32 %v646, %v1346
    %v1376 = vmul.f32 %v653, %v1346
    %v1377 = vmul.f32 %v660, %v1346
    %v1378 = vmul.f32 %v667, %v1346
    %v1379 = vmul.f32 %v674, %v1346
    %v1380 = vmul.f32 %v681, %v1346
    %v1381 = vmul.f32 %v688, %v1346
    %v1382 = vmul.f32 %v695, %v1346
    %v1383 = vmul.f32 %v702, %v1346
    %v1384 = vmul.f32 %v709, %v1346
    %v1385 = vmul.f32 %v716, %v1346
    %v1386 = vmul.f32 %v723, %v1346
    %v1387 = vmul.f32 %v730, %v1346
    %v1388 = vmul.f32 %v737, %v1346
    %v1389 = vmul.f32 %v744, %v1346
    %v1390 = vmul.f32 %v751, %v1346
    %v1391 = vmul.f32 %v758, %v1346
    %v1392 = vmul.f32 %v765, %v1346
    %v1393 = vmul.f32 %v772, %v1346
    %v1394 = vmul.f32 %v779, %v1346
    %v1395 = vmul.f32 %v786, %v1346
    %v1396 = vmul.f32 %v793, %v1346
    %v1397 = vmul.f32 %v800, %v1346
    %v1398 = vmul.f32 %v807, %v1346
    %v1399 = vmul.f32 %v814, %v1346
    %v1400 = vmul.f32 %v821, %v1346
    %v1401 = vmul.f32 %v828, %v1346
    %v1402 = vmul.f32 %v835, %v1346
    %v1403 = vmul.f32 %v842, %v1346
    %v1404 = vmul.f32 %v849, %v1346
    %v1405 = vmul.f32 %v856, %v1346
    %v1406 = vmul.f32 %v863, %v1346
    %v1407 = vmul.f32 %v870, %v1346
    %v1408 = vmul.f32 %v877, %v1346
    %v1409 = vmul.f32 %v884, %v1346
    %v1410 = vmul.f32 %v891, %v1346
    %v1411 = vmul.f32 %v898, %v1346
    %v1412 = vmul.f32 %v905, %v1346
    %v1413 = vmul.f32 %v912, %v1346
    %v1414 = vmul.f32 %v919, %v1346
    %v1415 = vmul.f32 %v926, %v1346
    %v1416 = vmul.f32 %v933, %v1346
    %v1417 = vmul.f32 %v940, %v1346
    %v1418 = vmul.f32 %v947, %v1346
    %v1419 = vmul.f32 %v954, %v1346
    %v1420 = vmul.f32 %v961, %v1346
    %v1421 = vmul.f32 %v968, %v1346
    %v1422 = vmul.f32 %v975, %v1346
    %v1423 = vmul.f32 %v982, %v1346
    %v1424 = vmul.f32 %v989, %v1346
    %v1425 = vmul.f32 %v996, %v1346
    %v1426 = vmul.f32 %v1003, %v1346
    %v1427 = vmul.f32 %v1010, %v1346
    %v1428 = vmul.f32 %v1017, %v1346
    %v1429 = vmul.f32 %v1024, %v1346
    %v1430 = vmul.f32 %v1031, %v1346
    %v1431 = vmul.f32 %v1038, %v1346
    %v1432 = vmul.f32 %v1045, %v1346
    %v1433 = vmul.f32 %v1052, %v1346
    %v1434 = vmul.f32 %v1059, %v1346
    %v1435 = vmul.f32 %v1066, %v1346
    %v1436 = vmul.f32 %v1073, %v1346
    %v1437 = vmul.f32 %v1080, %v1346
    %v1438 = vmul.f32 %v1087, %v1346
    %v1439 = vmul.f32 %v1094, %v1346
    %v1440 = vmul.f32 %v1101, %v1346
    %v1441 = vmul.f32 %v1108, %v1346
    %v1442 = vmul.f32 %v1115, %v1346
    %v1443 = vmul.f32 %v1122, %v1346
    %v1444 = vmul.f32 %v1129, %v1346
    %v1445 = vmul.f32 %v1136, %v1346
    %v1446 = vmul.f32 %v1143, %v1346
    %v1447 = vmul.f32 %v1150, %v1346
    %v1448 = vmul.f32 %v1157, %v1346
    %v1449 = vmul.f32 %v1164, %v1346
    %v1450 = vmul.f32 %v1171, %v1346
    %v1451 = vmul.f32 %v1178, %v1346
    %v1452 = vmul.f32 %v1185, %v1346
    %v1453 = vmul.f32 %v1192, %v1346
    %v1454 = vmul.f32 %v1199, %v1346
    %v1455 = vmul.f32 %v1206, %v1346
    %v1456 = vmul.f32 %v1213, %v1346
    %v1457 = vmul.f32 %v1220, %v1346
    %v1458 = vmul.f32 %v1227, %v1346
    %v1459 = vmul.f32 %v1234, %v1346
    %v1460 = vmul.f32 %v1241, %v1346
    %v1461 = vmul.f32 %v1248, %v1346
    %v1462 = vmul.f32 %v1255, %v1346
    %v1463 = vmul.f32 %v1262, %v1346
    %v1464 = vmul.f32 %v1269, %v1346
    %v1465 = vmul.f32 %v1276, %v1346
    %v1466 = vmul.f32 %v1283, %v1346
    %v1467 = vmul.f32 %v1290, %v1346
    %v1468 = vmul.f32 %v1297, %v1346
    %v1469 = vmul.f32 %v1304, %v1346
    %v1470 = vmul.f32 %v1311, %v1346
    %v1471 = vmul.f32 %v1318, %v1346
    %v1472 = vmul.f32 %v1325, %v1346
    %v1473 = vmul.f32 %v1332, %v1346
    %v1474 = vmul.f32 %v1339, %v1346
    %v1475 = vld [vmem:[#allocation5] sm:$0xff]
    %v1476 = vld [vmem:[#allocation5 + $0x8] sm:$0xff]
    %v1477 = vld [vmem:[#allocation5 + $0x10] sm:$0xff]
    %v1478 = vld [vmem:[#allocation5 + $0x18] sm:$0xff]
    %v1479 = vld [vmem:[#allocation5 + $0x20] sm:$0xff]
    %v1480 = vld [vmem:[#allocation5 + $0x28] sm:$0xff]
    %v1481 = vld [vmem:[#allocation5 + $0x30] sm:$0xff]
    %v1482 = vld [vmem:[#allocation5 + $0x38] sm:$0xff]
    %v1483 = vld [vmem:[#allocation5 + $0x40] sm:$0xff]
    %v1484 = vld [vmem:[#allocation5 + $0x48] sm:$0xff]
    %v1485 = vld [vmem:[#allocation5 + $0x50] sm:$0xff]
    %v1486 = vld [vmem:[#allocation5 + $0x58] sm:$0xff]
    %v1487 = vld [vmem:[#allocation5 + $0x60] sm:$0xff]
    %v1488 = vld [vmem:[#allocation5 + $0x68] sm:$0xff]
    %v1489 = vld [vmem:[#allocation5 + $0x70] sm:$0xff]
    %v1490 = vld [vmem:[#allocation5 + $0x78] sm:$0xff]
    %v1491 = vld [vmem:[#allocation5 + $0x80] sm:$0xff]
    %v1492 = vld [vmem:[#allocation5 + $0x88] sm:$0xff]
    %v1493 = vld [vmem:[#allocation5 + $0x90] sm:$0xff]
    %v1494 = vld [vmem:[#allocation5 + $0x98] sm:$0xff]
    %v1495 = vld [vmem:[#allocation5 + $0xa0] sm:$0xff]
    %v1496 = vld [vmem:[#allocation5 + $0xa8] sm:$0xff]
    %v1497 = vld [vmem:[#allocation5 + $0xb0] sm:$0xff]
    %v1498 = vld [vmem:[#allocation5 + $0xb8] sm:$0xff]
    %v1499 = vld [vmem:[#allocation5 + $0xc0] sm:$0xff]
    %v1500 = vld [vmem:[#allocation5 + $0xc8] sm:$0xff]
    %v1501 = vld [vmem:[#allocation5 + $0xd0] sm:$0xff]
    %v1502 = vld [vmem:[#allocation5 + $0xd8] sm:$0xff]
    %v1503 = vld [vmem:[#allocation5 + $0xe0] sm:$0xff]
    %v1504 = vld [vmem:[#allocation5 + $0xe8] sm:$0xff]
    %v1505 = vld [vmem:[#allocation5 + $0xf0] sm:$0xff]
    %v1506 = vld [vmem:[#allocation5 + $0xf8] sm:$0xff]
    %v1507 = vld [vmem:[#allocation5 + $0x100] sm:$0xff]
    %v1508 = vld [vmem:[#allocation5 + $0x108] sm:$0xff]
    %v1509 = vld [vmem:[#allocation5 + $0x110] sm:$0xff]
    %v1510 = vld [vmem:[#allocation5 + $0x118] sm:$0xff]
    %v1511 = vld [vmem:[#allocation5 + $0x120] sm:$0xff]
    %v1512 = vld [vmem:[#allocation5 + $0x128] sm:$0xff]
    %v1513 = vld [vmem:[#allocation5 + $0x130] sm:$0xff]
    %v1514 = vld [vmem:[#allocation5 + $0x138] sm:$0xff]
    %v1515 = vld [vmem:[#allocation5 + $0x140] sm:$0xff]
    %v1516 = vld [vmem:[#allocation5 + $0x148] sm:$0xff]
    %v1517 = vld [vmem:[#allocation5 + $0x150] sm:$0xff]
    %v1518 = vld [vmem:[#allocation5 + $0x158] sm:$0xff]
    %v1519 = vld [vmem:[#allocation5 + $0x160] sm:$0xff]
    %v1520 = vld [vmem:[#allocation5 + $0x168] sm:$0xff]
    %v1521 = vld [vmem:[#allocation5 + $0x170] sm:$0xff]
    %v1522 = vld [vmem:[#allocation5 + $0x178] sm:$0xff]
    %v1523 = vld [vmem:[#allocation5 + $0x180] sm:$0xff]
    %v1524 = vld [vmem:[#allocation5 + $0x188] sm:$0xff]
    %v1525 = vld [vmem:[#allocation5 + $0x190] sm:$0xff]
    %v1526 = vld [vmem:[#allocation5 + $0x198] sm:$0xff]
    %v1527 = vld [vmem:[#allocation5 + $0x1a0] sm:$0xff]
    %v1528 = vld [vmem:[#allocation5 + $0x1a8] sm:$0xff]
    %v1529 = vld [vmem:[#allocation5 + $0x1b0] sm:$0xff]
    %v1530 = vld [vmem:[#allocation5 + $0x1b8] sm:$0xff]
    %v1531 = vld [vmem:[#allocation5 + $0x1c0] sm:$0xff]
    %v1532 = vld [vmem:[#allocation5 + $0x1c8] sm:$0xff]
    %v1533 = vld [vmem:[#allocation5 + $0x1d0] sm:$0xff]
    %v1534 = vld [vmem:[#allocation5 + $0x1d8] sm:$0xff]
    %v1535 = vld [vmem:[#allocation5 + $0x1e0] sm:$0xff]
    %v1536 = vld [vmem:[#allocation5 + $0x1e8] sm:$0xff]
    %v1537 = vld [vmem:[#allocation5 + $0x1f0] sm:$0xff]
    %v1538 = vld [vmem:[#allocation5 + $0x1f8] sm:$0xff]
    %v1539 = vld [vmem:[#allocation5 + $0x200] sm:$0xff]
    %v1540 = vld [vmem:[#allocation5 + $0x208] sm:$0xff]
    %v1541 = vld [vmem:[#allocation5 + $0x210] sm:$0xff]
    %v1542 = vld [vmem:[#allocation5 + $0x218] sm:$0xff]
    %v1543 = vld [vmem:[#allocation5 + $0x220] sm:$0xff]
    %v1544 = vld [vmem:[#allocation5 + $0x228] sm:$0xff]
    %v1545 = vld [vmem:[#allocation5 + $0x230] sm:$0xff]
    %v1546 = vld [vmem:[#allocation5 + $0x238] sm:$0xff]
    %v1547 = vld [vmem:[#allocation5 + $0x240] sm:$0xff]
    %v1548 = vld [vmem:[#allocation5 + $0x248] sm:$0xff]
    %v1549 = vld [vmem:[#allocation5 + $0x250] sm:$0xff]
    %v1550 = vld [vmem:[#allocation5 + $0x258] sm:$0xff]
    %v1551 = vld [vmem:[#allocation5 + $0x260] sm:$0xff]
    %v1552 = vld [vmem:[#allocation5 + $0x268] sm:$0xff]
    %v1553 = vld [vmem:[#allocation5 + $0x270] sm:$0xff]
    %v1554 = vld [vmem:[#allocation5 + $0x278] sm:$0xff]
    %v1555 = vld [vmem:[#allocation5 + $0x280] sm:$0xff]
    %v1556 = vld [vmem:[#allocation5 + $0x288] sm:$0xff]
    %v1557 = vld [vmem:[#allocation5 + $0x290] sm:$0xff]
    %v1558 = vld [vmem:[#allocation5 + $0x298] sm:$0xff]
    %v1559 = vld [vmem:[#allocation5 + $0x2a0] sm:$0xff]
    %v1560 = vld [vmem:[#allocation5 + $0x2a8] sm:$0xff]
    %v1561 = vld [vmem:[#allocation5 + $0x2b0] sm:$0xff]
    %v1562 = vld [vmem:[#allocation5 + $0x2b8] sm:$0xff]
    %v1563 = vld [vmem:[#allocation5 + $0x2c0] sm:$0xff]
    %v1564 = vld [vmem:[#allocation5 + $0x2c8] sm:$0xff]
    %v1565 = vld [vmem:[#allocation5 + $0x2d0] sm:$0xff]
    %v1566 = vld [vmem:[#allocation5 + $0x2d8] sm:$0xff]
    %v1567 = vld [vmem:[#allocation5 + $0x2e0] sm:$0xff]
    %v1568 = vld [vmem:[#allocation5 + $0x2e8] sm:$0xff]
    %v1569 = vld [vmem:[#allocation5 + $0x2f0] sm:$0xff]
    %v1570 = vld [vmem:[#allocation5 + $0x2f8] sm:$0xff]
    %v1571 = vld [vmem:[#allocation5 + $0x300] sm:$0xff]
    %v1572 = vld [vmem:[#allocation5 + $0x308] sm:$0xff]
    %v1573 = vld [vmem:[#allocation5 + $0x310] sm:$0xff]
    %v1574 = vld [vmem:[#allocation5 + $0x318] sm:$0xff]
    %v1575 = vld [vmem:[#allocation5 + $0x320] sm:$0xff]
    %v1576 = vld [vmem:[#allocation5 + $0x328] sm:$0xff]
    %v1577 = vld [vmem:[#allocation5 + $0x330] sm:$0xff]
    %v1578 = vld [vmem:[#allocation5 + $0x338] sm:$0xff]
    %v1579 = vld [vmem:[#allocation5 + $0x340] sm:$0xff]
    %v1580 = vld [vmem:[#allocation5 + $0x348] sm:$0xff]
    %v1581 = vld [vmem:[#allocation5 + $0x350] sm:$0xff]
    %v1582 = vld [vmem:[#allocation5 + $0x358] sm:$0xff]
    %v1583 = vld [vmem:[#allocation5 + $0x360] sm:$0xff]
    %v1584 = vld [vmem:[#allocation5 + $0x368] sm:$0xff]
    %v1585 = vld [vmem:[#allocation5 + $0x370] sm:$0xff]
    %v1586 = vld [vmem:[#allocation5 + $0x378] sm:$0xff]
    %v1587 = vld [vmem:[#allocation5 + $0x380] sm:$0xff]
    %v1588 = vld [vmem:[#allocation5 + $0x388] sm:$0xff]
    %v1589 = vld [vmem:[#allocation5 + $0x390] sm:$0xff]
    %v1590 = vld [vmem:[#allocation5 + $0x398] sm:$0xff]
    %v1591 = vld [vmem:[#allocation5 + $0x3a0] sm:$0xff]
    %v1592 = vld [vmem:[#allocation5 + $0x3a8] sm:$0xff]
    %v1593 = vld [vmem:[#allocation5 + $0x3b0] sm:$0xff]
    %v1594 = vld [vmem:[#allocation5 + $0x3b8] sm:$0xff]
    %v1595 = vld [vmem:[#allocation5 + $0x3c0] sm:$0xff]
    %v1596 = vld [vmem:[#allocation5 + $0x3c8] sm:$0xff]
    %v1597 = vld [vmem:[#allocation5 + $0x3d0] sm:$0xff]
    %v1598 = vld [vmem:[#allocation5 + $0x3d8] sm:$0xff]
    %v1599 = vld [vmem:[#allocation5 + $0x3e0] sm:$0xff]
    %v1600 = vld [vmem:[#allocation5 + $0x3e8] sm:$0xff]
    %v1601 = vld [vmem:[#allocation5 + $0x3f0] sm:$0xff]
    %v1602 = vld [vmem:[#allocation5 + $0x3f8] sm:$0xff]
    %v1603 = vld [vmem:[#allocation5 + $0x400] sm:$0xff]
    %v1604 = vld [vmem:[#allocation5 + $0x408] sm:$0xff]
    %v1605 = vld [vmem:[#allocation5 + $0x410] sm:$0xff]
    %v1606 = vld [vmem:[#allocation5 + $0x418] sm:$0xff]
    %v1607 = vld [vmem:[#allocation5 + $0x420] sm:$0xff]
    %v1608 = vld [vmem:[#allocation5 + $0x428] sm:$0xff]
    %v1609 = vld [vmem:[#allocation5 + $0x430] sm:$0xff]
    %v1610 = vld [vmem:[#allocation5 + $0x438] sm:$0xff]
    %v1611 = vld [vmem:[#allocation5 + $0x440] sm:$0xff]
    %v1612 = vld [vmem:[#allocation5 + $0x448] sm:$0xff]
    %v1613 = vld [vmem:[#allocation5 + $0x450] sm:$0xff]
    %v1614 = vld [vmem:[#allocation5 + $0x458] sm:$0xff]
    %v1615 = vld [vmem:[#allocation5 + $0x460] sm:$0xff]
    %v1616 = vld [vmem:[#allocation5 + $0x468] sm:$0xff]
    %v1617 = vld [vmem:[#allocation5 + $0x470] sm:$0xff]
    %v1618 = vld [vmem:[#allocation5 + $0x478] sm:$0xff]
    %v1619 = vld [vmem:[#allocation5 + $0x480] sm:$0xff]
    %v1620 = vld [vmem:[#allocation5 + $0x488] sm:$0xff]
    %v1621 = vld [vmem:[#allocation5 + $0x490] sm:$0xff]
    %v1622 = vld [vmem:[#allocation5 + $0x498] sm:$0xff]
    %v1623 = vld [vmem:[#allocation5 + $0x4a0] sm:$0xff]
    %v1624 = vld [vmem:[#allocation5 + $0x4a8] sm:$0xff]
    %v1625 = vld [vmem:[#allocation5 + $0x4b0] sm:$0xff]
    %v1626 = vld [vmem:[#allocation5 + $0x4b8] sm:$0xff]
    %v1627 = vld [vmem:[#allocation5 + $0x4c0] sm:$0xff]
    %v1628 = vld [vmem:[#allocation5 + $0x4c8] sm:$0xff]
    %v1629 = vld [vmem:[#allocation5 + $0x4d0] sm:$0xff]
    %v1630 = vld [vmem:[#allocation5 + $0x4d8] sm:$0xff]
    %v1631 = vld [vmem:[#allocation5 + $0x4e0] sm:$0xff]
    %v1632 = vld [vmem:[#allocation5 + $0x4e8] sm:$0xff]
    %v1633 = vld [vmem:[#allocation5 + $0x4f0] sm:$0xff]
    %v1634 = vld [vmem:[#allocation5 + $0x4f8] sm:$0xff]
    %v1635 = vld [vmem:[#allocation5 + $0x500] sm:$0xff]
    %v1636 = vld [vmem:[#allocation5 + $0x508] sm:$0xff]
    %v1637 = vld [vmem:[#allocation5 + $0x510] sm:$0xff]
    %v1638 = vld [vmem:[#allocation5 + $0x518] sm:$0xff]
    %v1639 = vld [vmem:[#allocation5 + $0x520] sm:$0xff]
    %v1640 = vld [vmem:[#allocation5 + $0x528] sm:$0xff]
    %v1641 = vld [vmem:[#allocation5 + $0x530] sm:$0xff]
    %v1642 = vld [vmem:[#allocation5 + $0x538] sm:$0xff]
    %v1643 = vld [vmem:[#allocation5 + $0x540] sm:$0xff]
    %v1644 = vld [vmem:[#allocation5 + $0x548] sm:$0xff]
    %v1645 = vld [vmem:[#allocation5 + $0x550] sm:$0xff]
    %v1646 = vld [vmem:[#allocation5 + $0x558] sm:$0xff]
    %v1647 = vld [vmem:[#allocation5 + $0x560] sm:$0xff]
    %v1648 = vld [vmem:[#allocation5 + $0x568] sm:$0xff]
    %v1649 = vld [vmem:[#allocation5 + $0x570] sm:$0xff]
    %v1650 = vld [vmem:[#allocation5 + $0x578] sm:$0xff]
    %v1651 = vld [vmem:[#allocation5 + $0x580] sm:$0xff]
    %v1652 = vld [vmem:[#allocation5 + $0x588] sm:$0xff]
    %v1653 = vld [vmem:[#allocation5 + $0x590] sm:$0xff]
    %v1654 = vld [vmem:[#allocation5 + $0x598] sm:$0xff]
    %v1655 = vld [vmem:[#allocation5 + $0x5a0] sm:$0xff]
    %v1656 = vld [vmem:[#allocation5 + $0x5a8] sm:$0xff]
    %v1657 = vld [vmem:[#allocation5 + $0x5b0] sm:$0xff]
    %v1658 = vld [vmem:[#allocation5 + $0x5b8] sm:$0xff]
    %v1659 = vld [vmem:[#allocation5 + $0x5c0] sm:$0xff]
    %v1660 = vld [vmem:[#allocation5 + $0x5c8] sm:$0xff]
    %v1661 = vld [vmem:[#allocation5 + $0x5d0] sm:$0xff]
    %v1662 = vld [vmem:[#allocation5 + $0x5d8] sm:$0xff]
    %v1663 = vld [vmem:[#allocation5 + $0x5e0] sm:$0xff]
    %v1664 = vld [vmem:[#allocation5 + $0x5e8] sm:$0xff]
    %v1665 = vld [vmem:[#allocation5 + $0x5f0] sm:$0xff]
    %v1666 = vld [vmem:[#allocation5 + $0x5f8] sm:$0xff]
    %v1667 = vld [vmem:[#allocation5 + $0x600] sm:$0xff]
    %v1668 = vld [vmem:[#allocation5 + $0x608] sm:$0xff]
    %v1669 = vld [vmem:[#allocation5 + $0x610] sm:$0xff]
    %v1670 = vld [vmem:[#allocation5 + $0x618] sm:$0xff]
    %v1671 = vld [vmem:[#allocation5 + $0x620] sm:$0xff]
    %v1672 = vld [vmem:[#allocation5 + $0x628] sm:$0xff]
    %v1673 = vld [vmem:[#allocation5 + $0x630] sm:$0xff]
    %v1674 = vld [vmem:[#allocation5 + $0x638] sm:$0xff]
    %v1675 = vld [vmem:[#allocation5 + $0x640] sm:$0xff]
    %v1676 = vld [vmem:[#allocation5 + $0x648] sm:$0xff]
    %v1677 = vld [vmem:[#allocation5 + $0x650] sm:$0xff]
    %v1678 = vld [vmem:[#allocation5 + $0x658] sm:$0xff]
    %v1679 = vld [vmem:[#allocation5 + $0x660] sm:$0xff]
    %v1680 = vld [vmem:[#allocation5 + $0x668] sm:$0xff]
    %v1681 = vld [vmem:[#allocation5 + $0x670] sm:$0xff]
    %v1682 = vld [vmem:[#allocation5 + $0x678] sm:$0xff]
    %v1683 = vld [vmem:[#allocation5 + $0x680] sm:$0xff]
    %v1684 = vld [vmem:[#allocation5 + $0x688] sm:$0xff]
    %v1685 = vld [vmem:[#allocation5 + $0x690] sm:$0xff]
    %v1686 = vld [vmem:[#allocation5 + $0x698] sm:$0xff]
    %v1687 = vld [vmem:[#allocation5 + $0x6a0] sm:$0xff]
    %v1688 = vld [vmem:[#allocation5 + $0x6a8] sm:$0xff]
    %v1689 = vld [vmem:[#allocation5 + $0x6b0] sm:$0xff]
    %v1690 = vld [vmem:[#allocation5 + $0x6b8] sm:$0xff]
    %v1691 = vld [vmem:[#allocation5 + $0x6c0] sm:$0xff]
    %v1692 = vld [vmem:[#allocation5 + $0x6c8] sm:$0xff]
    %v1693 = vld [vmem:[#allocation5 + $0x6d0] sm:$0xff]
    %v1694 = vld [vmem:[#allocation5 + $0x6d8] sm:$0xff]
    %v1695 = vld [vmem:[#allocation5 + $0x6e0] sm:$0xff]
    %v1696 = vld [vmem:[#allocation5 + $0x6e8] sm:$0xff]
    %v1697 = vld [vmem:[#allocation5 + $0x6f0] sm:$0xff]
    %v1698 = vld [vmem:[#allocation5 + $0x6f8] sm:$0xff]
    %v1699 = vld [vmem:[#allocation5 + $0x700] sm:$0xff]
    %v1700 = vld [vmem:[#allocation5 + $0x708] sm:$0xff]
    %v1701 = vld [vmem:[#allocation5 + $0x710] sm:$0xff]
    %v1702 = vld [vmem:[#allocation5 + $0x718] sm:$0xff]
    %v1703 = vld [vmem:[#allocation5 + $0x720] sm:$0xff]
    %v1704 = vld [vmem:[#allocation5 + $0x728] sm:$0xff]
    %v1705 = vld [vmem:[#allocation5 + $0x730] sm:$0xff]
    %v1706 = vld [vmem:[#allocation5 + $0x738] sm:$0xff]
    %v1707 = vld [vmem:[#allocation5 + $0x740] sm:$0xff]
    %v1708 = vld [vmem:[#allocation5 + $0x748] sm:$0xff]
    %v1709 = vld [vmem:[#allocation5 + $0x750] sm:$0xff]
    %v1710 = vld [vmem:[#allocation5 + $0x758] sm:$0xff]
    %v1711 = vld [vmem:[#allocation5 + $0x760] sm:$0xff]
    %v1712 = vld [vmem:[#allocation5 + $0x768] sm:$0xff]
    %v1713 = vld [vmem:[#allocation5 + $0x770] sm:$0xff]
    %v1714 = vld [vmem:[#allocation5 + $0x778] sm:$0xff]
    %v1715 = vld [vmem:[#allocation5 + $0x780] sm:$0xff]
    %v1716 = vld [vmem:[#allocation5 + $0x788] sm:$0xff]
    %v1717 = vld [vmem:[#allocation5 + $0x790] sm:$0xff]
    %v1718 = vld [vmem:[#allocation5 + $0x798] sm:$0xff]
    %v1719 = vld [vmem:[#allocation5 + $0x7a0] sm:$0xff]
    %v1720 = vld [vmem:[#allocation5 + $0x7a8] sm:$0xff]
    %v1721 = vld [vmem:[#allocation5 + $0x7b0] sm:$0xff]
    %v1722 = vld [vmem:[#allocation5 + $0x7b8] sm:$0xff]
    %v1723 = vld [vmem:[#allocation5 + $0x7c0] sm:$0xff]
    %v1724 = vld [vmem:[#allocation5 + $0x7c8] sm:$0xff]
    %v1725 = vld [vmem:[#allocation5 + $0x7d0] sm:$0xff]
    %v1726 = vld [vmem:[#allocation5 + $0x7d8] sm:$0xff]
    %v1727 = vld [vmem:[#allocation5 + $0x7e0] sm:$0xff]
    %v1728 = vld [vmem:[#allocation5 + $0x7e8] sm:$0xff]
    %v1729 = vld [vmem:[#allocation5 + $0x7f0] sm:$0xff]
    %v1730 = vld [vmem:[#allocation5 + $0x7f8] sm:$0xff]
    %v1731 = vld [vmem:[#allocation5 + $0x800] sm:$0xff]
    %v1732 = vld [vmem:[#allocation5 + $0x808] sm:$0xff]
    %v1733 = vld [vmem:[#allocation5 + $0x810] sm:$0xff]
    %v1734 = vld [vmem:[#allocation5 + $0x818] sm:$0xff]
    %v1735 = vld [vmem:[#allocation5 + $0x820] sm:$0xff]
    %v1736 = vld [vmem:[#allocation5 + $0x828] sm:$0xff]
    %v1737 = vld [vmem:[#allocation5 + $0x830] sm:$0xff]
    %v1738 = vld [vmem:[#allocation5 + $0x838] sm:$0xff]
    %v1739 = vld [vmem:[#allocation5 + $0x840] sm:$0xff]
    %v1740 = vld [vmem:[#allocation5 + $0x848] sm:$0xff]
    %v1741 = vld [vmem:[#allocation5 + $0x850] sm:$0xff]
    %v1742 = vld [vmem:[#allocation5 + $0x858] sm:$0xff]
    %v1743 = vld [vmem:[#allocation5 + $0x860] sm:$0xff]
    %v1744 = vld [vmem:[#allocation5 + $0x868] sm:$0xff]
    %v1745 = vld [vmem:[#allocation5 + $0x870] sm:$0xff]
    %v1746 = vld [vmem:[#allocation5 + $0x878] sm:$0xff]
    %v1747 = vld [vmem:[#allocation5 + $0x880] sm:$0xff]
    %v1748 = vld [vmem:[#allocation5 + $0x888] sm:$0xff]
    %v1749 = vld [vmem:[#allocation5 + $0x890] sm:$0xff]
    %v1750 = vld [vmem:[#allocation5 + $0x898] sm:$0xff]
    %v1751 = vld [vmem:[#allocation5 + $0x8a0] sm:$0xff]
    %v1752 = vld [vmem:[#allocation5 + $0x8a8] sm:$0xff]
    %v1753 = vld [vmem:[#allocation5 + $0x8b0] sm:$0xff]
    %v1754 = vld [vmem:[#allocation5 + $0x8b8] sm:$0xff]
    %v1755 = vld [vmem:[#allocation5 + $0x8c0] sm:$0xff]
    %v1756 = vld [vmem:[#allocation5 + $0x8c8] sm:$0xff]
    %v1757 = vld [vmem:[#allocation5 + $0x8d0] sm:$0xff]
    %v1758 = vld [vmem:[#allocation5 + $0x8d8] sm:$0xff]
    %v1759 = vld [vmem:[#allocation5 + $0x8e0] sm:$0xff]
    %v1760 = vld [vmem:[#allocation5 + $0x8e8] sm:$0xff]
    %v1761 = vld [vmem:[#allocation5 + $0x8f0] sm:$0xff]
    %v1762 = vld [vmem:[#allocation5 + $0x8f8] sm:$0xff]
    %v1763 = vld [vmem:[#allocation5 + $0x900] sm:$0xff]
    %v1764 = vld [vmem:[#allocation5 + $0x908] sm:$0xff]
    %v1765 = vld [vmem:[#allocation5 + $0x910] sm:$0xff]
    %v1766 = vld [vmem:[#allocation5 + $0x918] sm:$0xff]
    %v1767 = vld [vmem:[#allocation5 + $0x920] sm:$0xff]
    %v1768 = vld [vmem:[#allocation5 + $0x928] sm:$0xff]
    %v1769 = vld [vmem:[#allocation5 + $0x930] sm:$0xff]
    %v1770 = vld [vmem:[#allocation5 + $0x938] sm:$0xff]
    %v1771 = vld [vmem:[#allocation5 + $0x940] sm:$0xff]
    %v1772 = vld [vmem:[#allocation5 + $0x948] sm:$0xff]
    %v1773 = vld [vmem:[#allocation5 + $0x950] sm:$0xff]
    %v1774 = vld [vmem:[#allocation5 + $0x958] sm:$0xff]
    %v1775 = vld [vmem:[#allocation5 + $0x960] sm:$0xff]
    %v1776 = vld [vmem:[#allocation5 + $0x968] sm:$0xff]
    %v1777 = vld [vmem:[#allocation5 + $0x970] sm:$0xff]
    %v1778 = vld [vmem:[#allocation5 + $0x978] sm:$0xff]
    %v1779 = vld [vmem:[#allocation5 + $0x980] sm:$0xff]
    %v1780 = vld [vmem:[#allocation5 + $0x988] sm:$0xff]
    %v1781 = vld [vmem:[#allocation5 + $0x990] sm:$0xff]
    %v1782 = vld [vmem:[#allocation5 + $0x998] sm:$0xff]
    %v1783 = vld [vmem:[#allocation5 + $0x9a0] sm:$0xff]
    %v1784 = vld [vmem:[#allocation5 + $0x9a8] sm:$0xff]
    %v1785 = vld [vmem:[#allocation5 + $0x9b0] sm:$0xff]
    %v1786 = vld [vmem:[#allocation5 + $0x9b8] sm:$0xff]
    %v1787 = vld [vmem:[#allocation5 + $0x9c0] sm:$0xff]
    %v1788 = vld [vmem:[#allocation5 + $0x9c8] sm:$0xff]
    %v1789 = vld [vmem:[#allocation5 + $0x9d0] sm:$0xff]
    %v1790 = vld [vmem:[#allocation5 + $0x9d8] sm:$0xff]
    %v1791 = vld [vmem:[#allocation5 + $0x9e0] sm:$0xff]
    %v1792 = vld [vmem:[#allocation5 + $0x9e8] sm:$0xff]
    %v1793 = vld [vmem:[#allocation5 + $0x9f0] sm:$0xff]
    %v1794 = vld [vmem:[#allocation5 + $0x9f8] sm:$0xff]
    %v1795 = vld [vmem:[#allocation5 + $0xa00] sm:$0xff]
    %v1796 = vld [vmem:[#allocation5 + $0xa08] sm:$0xff]
    %v1797 = vld [vmem:[#allocation5 + $0xa10] sm:$0xff]
    %v1798 = vld [vmem:[#allocation5 + $0xa18] sm:$0xff]
    %v1799 = vld [vmem:[#allocation5 + $0xa20] sm:$0xff]
    %v1800 = vld [vmem:[#allocation5 + $0xa28] sm:$0xff]
    %v1801 = vld [vmem:[#allocation5 + $0xa30] sm:$0xff]
    %v1802 = vld [vmem:[#allocation5 + $0xa38] sm:$0xff]
    %v1803 = vld [vmem:[#allocation5 + $0xa40] sm:$0xff]
    %v1804 = vld [vmem:[#allocation5 + $0xa48] sm:$0xff]
    %v1805 = vld [vmem:[#allocation5 + $0xa50] sm:$0xff]
    %v1806 = vld [vmem:[#allocation5 + $0xa58] sm:$0xff]
    %v1807 = vld [vmem:[#allocation5 + $0xa60] sm:$0xff]
    %v1808 = vld [vmem:[#allocation5 + $0xa68] sm:$0xff]
    %v1809 = vld [vmem:[#allocation5 + $0xa70] sm:$0xff]
    %v1810 = vld [vmem:[#allocation5 + $0xa78] sm:$0xff]
    %v1811 = vld [vmem:[#allocation5 + $0xa80] sm:$0xff]
    %v1812 = vld [vmem:[#allocation5 + $0xa88] sm:$0xff]
    %v1813 = vld [vmem:[#allocation5 + $0xa90] sm:$0xff]
    %v1814 = vld [vmem:[#allocation5 + $0xa98] sm:$0xff]
    %v1815 = vld [vmem:[#allocation5 + $0xaa0] sm:$0xff]
    %v1816 = vld [vmem:[#allocation5 + $0xaa8] sm:$0xff]
    %v1817 = vld [vmem:[#allocation5 + $0xab0] sm:$0xff]
    %v1818 = vld [vmem:[#allocation5 + $0xab8] sm:$0xff]
    %v1819 = vld [vmem:[#allocation5 + $0xac0] sm:$0xff]
    %v1820 = vld [vmem:[#allocation5 + $0xac8] sm:$0xff]
    %v1821 = vld [vmem:[#allocation5 + $0xad0] sm:$0xff]
    %v1822 = vld [vmem:[#allocation5 + $0xad8] sm:$0xff]
    %v1823 = vld [vmem:[#allocation5 + $0xae0] sm:$0xff]
    %v1824 = vld [vmem:[#allocation5 + $0xae8] sm:$0xff]
    %v1825 = vld [vmem:[#allocation5 + $0xaf0] sm:$0xff]
    %v1826 = vld [vmem:[#allocation5 + $0xaf8] sm:$0xff]
    %v1827 = vld [vmem:[#allocation5 + $0xb00] sm:$0xff]
    %v1828 = vld [vmem:[#allocation5 + $0xb08] sm:$0xff]
    %v1829 = vld [vmem:[#allocation5 + $0xb10] sm:$0xff]
    %v1830 = vld [vmem:[#allocation5 + $0xb18] sm:$0xff]
    %v1831 = vld [vmem:[#allocation5 + $0xb20] sm:$0xff]
    %v1832 = vld [vmem:[#allocation5 + $0xb28] sm:$0xff]
    %v1833 = vld [vmem:[#allocation5 + $0xb30] sm:$0xff]
    %v1834 = vld [vmem:[#allocation5 + $0xb38] sm:$0xff]
    %v1835 = vld [vmem:[#allocation5 + $0xb40] sm:$0xff]
    %v1836 = vld [vmem:[#allocation5 + $0xb48] sm:$0xff]
    %v1837 = vld [vmem:[#allocation5 + $0xb50] sm:$0xff]
    %v1838 = vld [vmem:[#allocation5 + $0xb58] sm:$0xff]
    %v1839 = vld [vmem:[#allocation5 + $0xb60] sm:$0xff]
    %v1840 = vld [vmem:[#allocation5 + $0xb68] sm:$0xff]
    %v1841 = vld [vmem:[#allocation5 + $0xb70] sm:$0xff]
    %v1842 = vld [vmem:[#allocation5 + $0xb78] sm:$0xff]
    %v1843 = vld [vmem:[#allocation5 + $0xb80] sm:$0xff]
    %v1844 = vld [vmem:[#allocation5 + $0xb88] sm:$0xff]
    %v1845 = vld [vmem:[#allocation5 + $0xb90] sm:$0xff]
    %v1846 = vld [vmem:[#allocation5 + $0xb98] sm:$0xff]
    %v1847 = vld [vmem:[#allocation5 + $0xba0] sm:$0xff]
    %v1848 = vld [vmem:[#allocation5 + $0xba8] sm:$0xff]
    %v1849 = vld [vmem:[#allocation5 + $0xbb0] sm:$0xff]
    %v1850 = vld [vmem:[#allocation5 + $0xbb8] sm:$0xff]
    %v1851 = vld [vmem:[#allocation5 + $0xbc0] sm:$0xff]
    %v1852 = vld [vmem:[#allocation5 + $0xbc8] sm:$0xff]
    %v1853 = vld [vmem:[#allocation5 + $0xbd0] sm:$0xff]
    %v1854 = vld [vmem:[#allocation5 + $0xbd8] sm:$0xff]
    %v1855 = vld [vmem:[#allocation5 + $0xbe0] sm:$0xff]
    %v1856 = vld [vmem:[#allocation5 + $0xbe8] sm:$0xff]
    %v1857 = vld [vmem:[#allocation5 + $0xbf0] sm:$0xff]
    %v1858 = vld [vmem:[#allocation5 + $0xbf8] sm:$0xff]
    %v1859 = vld [vmem:[#allocation5 + $0xc00] sm:$0xff]
    %v1860 = vld [vmem:[#allocation5 + $0xc08] sm:$0xff]
    %v1861 = vld [vmem:[#allocation5 + $0xc10] sm:$0xff]
    %v1862 = vld [vmem:[#allocation5 + $0xc18] sm:$0xff]
    %v1863 = vld [vmem:[#allocation5 + $0xc20] sm:$0xff]
    %v1864 = vld [vmem:[#allocation5 + $0xc28] sm:$0xff]
    %v1865 = vld [vmem:[#allocation5 + $0xc30] sm:$0xff]
    %v1866 = vld [vmem:[#allocation5 + $0xc38] sm:$0xff]
    %v1867 = vld [vmem:[#allocation5 + $0xc40] sm:$0xff]
    %v1868 = vld [vmem:[#allocation5 + $0xc48] sm:$0xff]
    %v1869 = vld [vmem:[#allocation5 + $0xc50] sm:$0xff]
    %v1870 = vld [vmem:[#allocation5 + $0xc58] sm:$0xff]
    %v1871 = vld [vmem:[#allocation5 + $0xc60] sm:$0xff]
    %v1872 = vld [vmem:[#allocation5 + $0xc68] sm:$0xff]
    %v1873 = vld [vmem:[#allocation5 + $0xc70] sm:$0xff]
    %v1874 = vld [vmem:[#allocation5 + $0xc78] sm:$0xff]
    %v1875 = vld [vmem:[#allocation5 + $0xc80] sm:$0xff]
    %v1876 = vld [vmem:[#allocation5 + $0xc88] sm:$0xff]
    %v1877 = vld [vmem:[#allocation5 + $0xc90] sm:$0xff]
    %v1878 = vld [vmem:[#allocation5 + $0xc98] sm:$0xff]
    %v1879 = vld [vmem:[#allocation5 + $0xca0] sm:$0xff]
    %v1880 = vld [vmem:[#allocation5 + $0xca8] sm:$0xff]
    %v1881 = vld [vmem:[#allocation5 + $0xcb0] sm:$0xff]
    %v1882 = vld [vmem:[#allocation5 + $0xcb8] sm:$0xff]
    %v1883 = vld [vmem:[#allocation5 + $0xcc0] sm:$0xff]
    %v1884 = vld [vmem:[#allocation5 + $0xcc8] sm:$0xff]
    %v1885 = vld [vmem:[#allocation5 + $0xcd0] sm:$0xff]
    %v1886 = vld [vmem:[#allocation5 + $0xcd8] sm:$0xff]
    %v1887 = vld [vmem:[#allocation5 + $0xce0] sm:$0xff]
    %v1888 = vld [vmem:[#allocation5 + $0xce8] sm:$0xff]
    %v1889 = vld [vmem:[#allocation5 + $0xcf0] sm:$0xff]
    %v1890 = vld [vmem:[#allocation5 + $0xcf8] sm:$0xff]
    %v1891 = vld [vmem:[#allocation5 + $0xd00] sm:$0xff]
    %v1892 = vld [vmem:[#allocation5 + $0xd08] sm:$0xff]
    %v1893 = vld [vmem:[#allocation5 + $0xd10] sm:$0xff]
    %v1894 = vld [vmem:[#allocation5 + $0xd18] sm:$0xff]
    %v1895 = vld [vmem:[#allocation5 + $0xd20] sm:$0xff]
    %v1896 = vld [vmem:[#allocation5 + $0xd28] sm:$0xff]
    %v1897 = vld [vmem:[#allocation5 + $0xd30] sm:$0xff]
    %v1898 = vld [vmem:[#allocation5 + $0xd38] sm:$0xff]
    %v1899 = vld [vmem:[#allocation5 + $0xd40] sm:$0xff]
    %v1900 = vld [vmem:[#allocation5 + $0xd48] sm:$0xff]
    %v1901 = vld [vmem:[#allocation5 + $0xd50] sm:$0xff]
    %v1902 = vld [vmem:[#allocation5 + $0xd58] sm:$0xff]
    %v1903 = vld [vmem:[#allocation5 + $0xd60] sm:$0xff]
    %v1904 = vld [vmem:[#allocation5 + $0xd68] sm:$0xff]
    %v1905 = vld [vmem:[#allocation5 + $0xd70] sm:$0xff]
    %v1906 = vld [vmem:[#allocation5 + $0xd78] sm:$0xff]
    %v1907 = vld [vmem:[#allocation5 + $0xd80] sm:$0xff]
    %v1908 = vld [vmem:[#allocation5 + $0xd88] sm:$0xff]
    %v1909 = vld [vmem:[#allocation5 + $0xd90] sm:$0xff]
    %v1910 = vld [vmem:[#allocation5 + $0xd98] sm:$0xff]
    %v1911 = vld [vmem:[#allocation5 + $0xda0] sm:$0xff]
    %v1912 = vld [vmem:[#allocation5 + $0xda8] sm:$0xff]
    %v1913 = vld [vmem:[#allocation5 + $0xdb0] sm:$0xff]
    %v1914 = vld [vmem:[#allocation5 + $0xdb8] sm:$0xff]
    %v1915 = vld [vmem:[#allocation5 + $0xdc0] sm:$0xff]
    %v1916 = vld [vmem:[#allocation5 + $0xdc8] sm:$0xff]
    %v1917 = vld [vmem:[#allocation5 + $0xdd0] sm:$0xff]
    %v1918 = vld [vmem:[#allocation5 + $0xdd8] sm:$0xff]
    %v1919 = vld [vmem:[#allocation5 + $0xde0] sm:$0xff]
    %v1920 = vld [vmem:[#allocation5 + $0xde8] sm:$0xff]
    %v1921 = vld [vmem:[#allocation5 + $0xdf0] sm:$0xff]
    %v1922 = vld [vmem:[#allocation5 + $0xdf8] sm:$0xff]
    %v1923 = vld [vmem:[#allocation5 + $0xe00] sm:$0xff]
    %v1924 = vld [vmem:[#allocation5 + $0xe08] sm:$0xff]
    %v1925 = vld [vmem:[#allocation5 + $0xe10] sm:$0xff]
    %v1926 = vld [vmem:[#allocation5 + $0xe18] sm:$0xff]
    %v1927 = vld [vmem:[#allocation5 + $0xe20] sm:$0xff]
    %v1928 = vld [vmem:[#allocation5 + $0xe28] sm:$0xff]
    %v1929 = vld [vmem:[#allocation5 + $0xe30] sm:$0xff]
    %v1930 = vld [vmem:[#allocation5 + $0xe38] sm:$0xff]
    %v1931 = vld [vmem:[#allocation5 + $0xe40] sm:$0xff]
    %v1932 = vld [vmem:[#allocation5 + $0xe48] sm:$0xff]
    %v1933 = vld [vmem:[#allocation5 + $0xe50] sm:$0xff]
    %v1934 = vld [vmem:[#allocation5 + $0xe58] sm:$0xff]
    %v1935 = vld [vmem:[#allocation5 + $0xe60] sm:$0xff]
    %v1936 = vld [vmem:[#allocation5 + $0xe68] sm:$0xff]
    %v1937 = vld [vmem:[#allocation5 + $0xe70] sm:$0xff]
    %v1938 = vld [vmem:[#allocation5 + $0xe78] sm:$0xff]
    %v1939 = vld [vmem:[#allocation5 + $0xe80] sm:$0xff]
    %v1940 = vld [vmem:[#allocation5 + $0xe88] sm:$0xff]
    %v1941 = vld [vmem:[#allocation5 + $0xe90] sm:$0xff]
    %v1942 = vld [vmem:[#allocation5 + $0xe98] sm:$0xff]
    %v1943 = vld [vmem:[#allocation5 + $0xea0] sm:$0xff]
    %v1944 = vld [vmem:[#allocation5 + $0xea8] sm:$0xff]
    %v1945 = vld [vmem:[#allocation5 + $0xeb0] sm:$0xff]
    %v1946 = vld [vmem:[#allocation5 + $0xeb8] sm:$0xff]
    %v1947 = vld [vmem:[#allocation5 + $0xec0] sm:$0xff]
    %v1948 = vld [vmem:[#allocation5 + $0xec8] sm:$0xff]
    %v1949 = vld [vmem:[#allocation5 + $0xed0] sm:$0xff]
    %v1950 = vld [vmem:[#allocation5 + $0xed8] sm:$0xff]
    %v1951 = vld [vmem:[#allocation5 + $0xee0] sm:$0xff]
    %v1952 = vld [vmem:[#allocation5 + $0xee8] sm:$0xff]
    %v1953 = vld [vmem:[#allocation5 + $0xef0] sm:$0xff]
    %v1954 = vld [vmem:[#allocation5 + $0xef8] sm:$0xff]
    %v1955 = vld [vmem:[#allocation5 + $0xf00] sm:$0xff]
    %v1956 = vld [vmem:[#allocation5 + $0xf08] sm:$0xff]
    %v1957 = vld [vmem:[#allocation5 + $0xf10] sm:$0xff]
    %v1958 = vld [vmem:[#allocation5 + $0xf18] sm:$0xff]
    %v1959 = vld [vmem:[#allocation5 + $0xf20] sm:$0xff]
    %v1960 = vld [vmem:[#allocation5 + $0xf28] sm:$0xff]
    %v1961 = vld [vmem:[#allocation5 + $0xf30] sm:$0xff]
    %v1962 = vld [vmem:[#allocation5 + $0xf38] sm:$0xff]
    %v1963 = vld [vmem:[#allocation5 + $0xf40] sm:$0xff]
    %v1964 = vld [vmem:[#allocation5 + $0xf48] sm:$0xff]
    %v1965 = vld [vmem:[#allocation5 + $0xf50] sm:$0xff]
    %v1966 = vld [vmem:[#allocation5 + $0xf58] sm:$0xff]
    %v1967 = vld [vmem:[#allocation5 + $0xf60] sm:$0xff]
    %v1968 = vld [vmem:[#allocation5 + $0xf68] sm:$0xff]
    %v1969 = vld [vmem:[#allocation5 + $0xf70] sm:$0xff]
    %v1970 = vld [vmem:[#allocation5 + $0xf78] sm:$0xff]
    %v1971 = vld [vmem:[#allocation5 + $0xf80] sm:$0xff]
    %v1972 = vld [vmem:[#allocation5 + $0xf88] sm:$0xff]
    %v1973 = vld [vmem:[#allocation5 + $0xf90] sm:$0xff]
    %v1974 = vld [vmem:[#allocation5 + $0xf98] sm:$0xff]
    %v1975 = vld [vmem:[#allocation5 + $0xfa0] sm:$0xff]
    %v1976 = vld [vmem:[#allocation5 + $0xfa8] sm:$0xff]
    %v1977 = vld [vmem:[#allocation5 + $0xfb0] sm:$0xff]
    %v1978 = vld [vmem:[#allocation5 + $0xfb8] sm:$0xff]
    %v1979 = vld [vmem:[#allocation5 + $0xfc0] sm:$0xff]
    %v1980 = vld [vmem:[#allocation5 + $0xfc8] sm:$0xff]
    %v1981 = vld [vmem:[#allocation5 + $0xfd0] sm:$0xff]
    %v1982 = vld [vmem:[#allocation5 + $0xfd8] sm:$0xff]
    %v1983 = vld [vmem:[#allocation5 + $0xfe0] sm:$0xff]
    %v1984 = vld [vmem:[#allocation5 + $0xfe8] sm:$0xff]
    %v1985 = vld [vmem:[#allocation5 + $0xff0] sm:$0xff]
    %v1986 = vld [vmem:[#allocation5 + $0xff8] sm:$0xff]
    %v1987 = vld [vmem:[#allocation7] sm:$0x3]
    %v1989 = vperm.slane %v1987, 0
    %v1990 = vperm.slane %v1987, 1
    %vm2121 = vcmask 1041409
    %v2122 = vsel %vm2121, %v1363, %v1347
    %vm2123 = vcmask 1042434
    %v2124 = vsel %vm2123, %v1379, %v2122
    %vm2125 = vcmask 1043459
    %v2126 = vsel %vm2125, %v1395, %v2124
    %vm2127 = vcmask 1044484
    %v2128 = vsel %vm2127, %v1411, %v2126
    %vm2129 = vcmask 1045509
    %v2130 = vsel %vm2129, %v1427, %v2128
    %vm2131 = vcmask 1046534
    %v2132 = vsel %vm2131, %v1443, %v2130
    %vm2133 = vcmask 1047559
    %v2134 = vsel %vm2133, %v1459, %v2132
    %v2135 = vsel %vm2121, %v1364, %v1348
    %v2136 = vsel %vm2123, %v1380, %v2135
    %v2137 = vsel %vm2125, %v1396, %v2136
    %v2138 = vsel %vm2127, %v1412, %v2137
    %v2139 = vsel %vm2129, %v1428, %v2138
    %v2140 = vsel %vm2131, %v1444, %v2139
    %v2141 = vsel %vm2133, %v1460, %v2140
    %v2142 = vsel %vm2121, %v1365, %v1349
    %v2143 = vsel %vm2123, %v1381, %v2142
    %v2144 = vsel %vm2125, %v1397, %v2143
    %v2145 = vsel %vm2127, %v1413, %v2144
    %v2146 = vsel %vm2129, %v1429, %v2145
    %v2147 = vsel %vm2131, %v1445, %v2146
    %v2148 = vsel %vm2133, %v1461, %v2147
    %v2149 = vsel %vm2121, %v1366, %v1350
    %v2150 = vsel %vm2123, %v1382, %v2149
    %v2151 = vsel %vm2125, %v1398, %v2150
    %v2152 = vsel %vm2127, %v1414, %v2151
    %v2153 = vsel %vm2129, %v1430, %v2152
    %v2154 = vsel %vm2131, %v1446, %v2153
    %v2155 = vsel %vm2133, %v1462, %v2154
    %v2156 = vsel %vm2121, %v1367, %v1351
    %v2157 = vsel %vm2123, %v1383, %v2156
    %v2158 = vsel %vm2125, %v1399, %v2157
    %v2159 = vsel %vm2127, %v1415, %v2158
    %v2160 = vsel %vm2129, %v1431, %v2159
    %v2161 = vsel %vm2131, %v1447, %v2160
    %v2162 = vsel %vm2133, %v1463, %v2161
    %v2163 = vsel %vm2121, %v1368, %v1352
    %v2164 = vsel %vm2123, %v1384, %v2163
    %v2165 = vsel %vm2125, %v1400, %v2164
    %v2166 = vsel %vm2127, %v1416, %v2165
    %v2167 = vsel %vm2129, %v1432, %v2166
    %v2168 = vsel %vm2131, %v1448, %v2167
    %v2169 = vsel %vm2133, %v1464, %v2168
    %v2170 = vsel %vm2121, %v1369, %v1353
    %v2171 = vsel %vm2123, %v1385, %v2170
    %v2172 = vsel %vm2125, %v1401, %v2171
    %v2173 = vsel %vm2127, %v1417, %v2172
    %v2174 = vsel %vm2129, %v1433, %v2173
    %v2175 = vsel %vm2131, %v1449, %v2174
    %v2176 = vsel %vm2133, %v1465, %v2175
    %v2177 = vsel %vm2121, %v1370, %v1354
    %v2178 = vsel %vm2123, %v1386, %v2177
    %v2179 = vsel %vm2125, %v1402, %v2178
    %v2180 = vsel %vm2127, %v1418, %v2179
    %v2181 = vsel %vm2129, %v1434, %v2180
    %v2182 = vsel %vm2131, %v1450, %v2181
    %v2183 = vsel %vm2133, %v1466, %v2182
    %v2184 = vsel %vm2121, %v1371, %v1355
    %v2185 = vsel %vm2123, %v1387, %v2184
    %v2186 = vsel %vm2125, %v1403, %v2185
    %v2187 = vsel %vm2127, %v1419, %v2186
    %v2188 = vsel %vm2129, %v1435, %v2187
    %v2189 = vsel %vm2131, %v1451, %v2188
    %v2190 = vsel %vm2133, %v1467, %v2189
    %v2191 = vsel %vm2121, %v1372, %v1356
    %v2192 = vsel %vm2123, %v1388, %v2191
    %v2193 = vsel %vm2125, %v1404, %v2192
    %v2194 = vsel %vm2127, %v1420, %v2193
    %v2195 = vsel %vm2129, %v1436, %v2194
    %v2196 = vsel %vm2131, %v1452, %v2195
    %v2197 = vsel %vm2133, %v1468, %v2196
    %v2198 = vsel %vm2121, %v1373, %v1357
    %v2199 = vsel %vm2123, %v1389, %v2198
    %v2200 = vsel %vm2125, %v1405, %v2199
    %v2201 = vsel %vm2127, %v1421, %v2200
    %v2202 = vsel %vm2129, %v1437, %v2201
    %v2203 = vsel %vm2131, %v1453, %v2202
    %v2204 = vsel %vm2133, %v1469, %v2203
    %v2205 = vsel %vm2121, %v1374, %v1358
    %v2206 = vsel %vm2123, %v1390, %v2205
    %v2207 = vsel %vm2125, %v1406, %v2206
    %v2208 = vsel %vm2127, %v1422, %v2207
    %v2209 = vsel %vm2129, %v1438, %v2208
    %v2210 = vsel %vm2131, %v1454, %v2209
    %v2211 = vsel %vm2133, %v1470, %v2210
    %v2212 = vsel %vm2121, %v1375, %v1359
    %v2213 = vsel %vm2123, %v1391, %v2212
    %v2214 = vsel %vm2125, %v1407, %v2213
    %v2215 = vsel %vm2127, %v1423, %v2214
    %v2216 = vsel %vm2129, %v1439, %v2215
    %v2217 = vsel %vm2131, %v1455, %v2216
    %v2218 = vsel %vm2133, %v1471, %v2217
    %v2219 = vsel %vm2121, %v1376, %v1360
    %v2220 = vsel %vm2123, %v1392, %v2219
    %v2221 = vsel %vm2125, %v1408, %v2220
    %v2222 = vsel %vm2127, %v1424, %v2221
    %v2223 = vsel %vm2129, %v1440, %v2222
    %v2224 = vsel %vm2131, %v1456, %v2223
    %v2225 = vsel %vm2133, %v1472, %v2224
    %v2226 = vsel %vm2121, %v1377, %v1361
    %v2227 = vsel %vm2123, %v1393, %v2226
    %v2228 = vsel %vm2125, %v1409, %v2227
    %v2229 = vsel %vm2127, %v1425, %v2228
    %v2230 = vsel %vm2129, %v1441, %v2229
    %v2231 = vsel %vm2131, %v1457, %v2230
    %v2232 = vsel %vm2133, %v1473, %v2231
    %v2233 = vsel %vm2121, %v1378, %v1362
    %v2234 = vsel %vm2123, %v1394, %v2233
    %v2235 = vsel %vm2125, %v1410, %v2234
    %v2236 = vsel %vm2127, %v1426, %v2235
    %v2237 = vsel %vm2129, %v1442, %v2236
    %v2238 = vsel %vm2131, %v1458, %v2237
    %v2239 = vsel %vm2133, %v1474, %v2238
    %2256 = vmatpush.msra.mxu0 %v1505
    %2257 = vmatpush.msra.mxu0 %v1503
    %2258 = vmatpush.msra.mxu0 %v1501
    %2259 = vmatpush.msra.mxu0 %v1499
    %2260 = vmatpush.msra.mxu0 %v1497
    %2261 = vmatpush.msra.mxu0 %v1495
    %2262 = vmatpush.msra.mxu0 %v1493
    %2263 = vmatpush.msra.mxu0 %v1491
    %2264 = vmatpush.msra.mxu0 %v1489
    %2265 = vmatpush.msra.mxu0 %v1487
    %2266 = vmatpush.msra.mxu0 %v1485
    %2267 = vmatpush.msra.mxu0 %v1483
    %2268 = vmatpush.msra.mxu0 %v1481
    %2269 = vmatpush.msra.mxu0 %v1479
    %2270 = vmatpush.msra.mxu0 %v1477
    %2271 = vmatpush.msra.mxu0 %v1475
    %2272 = vmatmul.f32.gmra.mxu0 %v2134
    %v2273 = vpop.f32.mrf.mxu0
    %v2274 = vadd.f32 %v1989, %v2273
    %2275 = vdwg.mxu0
    %2276 = vmatpush.msra.mxu0 %v1537
    %2277 = vmatpush.msra.mxu0 %v1535
    %2278 = vmatpush.msra.mxu0 %v1533
    %2279 = vmatpush.msra.mxu0 %v1531
    %2280 = vmatpush.msra.mxu0 %v1529
    %2281 = vmatpush.msra.mxu0 %v1527
    %2282 = vmatpush.msra.mxu0 %v1525
    %2283 = vmatpush.msra.mxu0 %v1523
    %2284 = vmatpush.msra.mxu0 %v1521
    %2285 = vmatpush.msra.mxu0 %v1519
    %2286 = vmatpush.msra.mxu0 %v1517
    %2287 = vmatpush.msra.mxu0 %v1515
    %2288 = vmatpush.msra.mxu0 %v1513
    %2289 = vmatpush.msra.mxu0 %v1511
    %2290 = vmatpush.msra.mxu0 %v1509
    %2291 = vmatpush.msra.mxu0 %v1507
    %2292 = vmatmul.f32.gmra.mxu0 %v2141
    %v2293 = vpop.f32.mrf.mxu0
    %v2294 = vadd.f32 %v2274, %v2293
    %2295 = vdwg.mxu0
    %2296 = vmatpush.msra.mxu0 %v1569
    %2297 = vmatpush.msra.mxu0 %v1567
    %2298 = vmatpush.msra.mxu0 %v1565
    %2299 = vmatpush.msra.mxu0 %v1563
    %2300 = vmatpush.msra.mxu0 %v1561
    %2301 = vmatpush.msra.mxu0 %v1559
    %2302 = vmatpush.msra.mxu0 %v1557
    %2303 = vmatpush.msra.mxu0 %v1555
    %2304 = vmatpush.msra.mxu0 %v1553
    %2305 = vmatpush.msra.mxu0 %v1551
    %2306 = vmatpush.msra.mxu0 %v1549
    %2307 = vmatpush.msra.mxu0 %v1547
    %2308 = vmatpush.msra.mxu0 %v1545
    %2309 = vmatpush.msra.mxu0 %v1543
    %2310 = vmatpush.msra.mxu0 %v1541
    %2311 = vmatpush.msra.mxu0 %v1539
    %2312 = vmatmul.f32.gmra.mxu0 %v2148
    %v2313 = vpop.f32.mrf.mxu0
    %v2314 = vadd.f32 %v2294, %v2313
    %2315 = vdwg.mxu0
    %2316 = vmatpush.msra.mxu0 %v1601
    %2317 = vmatpush.msra.mxu0 %v1599
    %2318 = vmatpush.msra.mxu0 %v1597
    %2319 = vmatpush.msra.mxu0 %v1595
    %2320 = vmatpush.msra.mxu0 %v1593
    %2321 = vmatpush.msra.mxu0 %v1591
    %2322 = vmatpush.msra.mxu0 %v1589
    %2323 = vmatpush.msra.mxu0 %v1587
    %2324 = vmatpush.msra.mxu0 %v1585
    %2325 = vmatpush.msra.mxu0 %v1583
    %2326 = vmatpush.msra.mxu0 %v1581
    %2327 = vmatpush.msra.mxu0 %v1579
    %2328 = vmatpush.msra.mxu0 %v1577
    %2329 = vmatpush.msra.mxu0 %v1575
    %2330 = vmatpush.msra.mxu0 %v1573
    %2331 = vmatpush.msra.mxu0 %v1571
    %2332 = vmatmul.f32.gmra.mxu0 %v2155
    %v2333 = vpop.f32.mrf.mxu0
    %v2334 = vadd.f32 %v2314, %v2333
    %2335 = vdwg.mxu0
    %2336 = vmatpush.msra.mxu0 %v1633
    %2337 = vmatpush.msra.mxu0 %v1631
    %2338 = vmatpush.msra.mxu0 %v1629
    %2339 = vmatpush.msra.mxu0 %v1627
    %2340 = vmatpush.msra.mxu0 %v1625
    %2341 = vmatpush.msra.mxu0 %v1623
    %2342 = vmatpush.msra.mxu0 %v1621
    %2343 = vmatpush.msra.mxu0 %v1619
    %2344 = vmatpush.msra.mxu0 %v1617
    %2345 = vmatpush.msra.mxu0 %v1615
    %2346 = vmatpush.msra.mxu0 %v1613
    %2347 = vmatpush.msra.mxu0 %v1611
    %2348 = vmatpush.msra.mxu0 %v1609
    %2349 = vmatpush.msra.mxu0 %v1607
    %2350 = vmatpush.msra.mxu0 %v1605
    %2351 = vmatpush.msra.mxu0 %v1603
    %2352 = vmatmul.f32.gmra.mxu0 %v2162
    %v2353 = vpop.f32.mrf.mxu0
    %v2354 = vadd.f32 %v2334, %v2353
    %2355 = vdwg.mxu0
    %2356 = vmatpush.msra.mxu0 %v1665
    %2357 = vmatpush.msra.mxu0 %v1663
    %2358 = vmatpush.msra.mxu0 %v1661
    %2359 = vmatpush.msra.mxu0 %v1659
    %2360 = vmatpush.msra.mxu0 %v1657
    %2361 = vmatpush.msra.mxu0 %v1655
    %2362 = vmatpush.msra.mxu0 %v1653
    %2363 = vmatpush.msra.mxu0 %v1651
    %2364 = vmatpush.msra.mxu0 %v1649
    %2365 = vmatpush.msra.mxu0 %v1647
    %2366 = vmatpush.msra.mxu0 %v1645
    %2367 = vmatpush.msra.mxu0 %v1643
    %2368 = vmatpush.msra.mxu0 %v1641
    %2369 = vmatpush.msra.mxu0 %v1639
    %2370 = vmatpush.msra.mxu0 %v1637
    %2371 = vmatpush.msra.mxu0 %v1635
    %2372 = vmatmul.f32.gmra.mxu0 %v2169
    %v2373 = vpop.f32.mrf.mxu0
    %v2374 = vadd.f32 %v2354, %v2373
    %2375 = vdwg.mxu0
    %2376 = vmatpush.msra.mxu0 %v1697
    %2377 = vmatpush.msra.mxu0 %v1695
    %2378 = vmatpush.msra.mxu0 %v1693
    %2379 = vmatpush.msra.mxu0 %v1691
    %2380 = vmatpush.msra.mxu0 %v1689
    %2381 = vmatpush.msra.mxu0 %v1687
    %2382 = vmatpush.msra.mxu0 %v1685
    %2383 = vmatpush.msra.mxu0 %v1683
    %2384 = vmatpush.msra.mxu0 %v1681
    %2385 = vmatpush.msra.mxu0 %v1679
    %2386 = vmatpush.msra.mxu0 %v1677
    %2387 = vmatpush.msra.mxu0 %v1675
    %2388 = vmatpush.msra.mxu0 %v1673
    %2389 = vmatpush.msra.mxu0 %v1671
    %2390 = vmatpush.msra.mxu0 %v1669
    %2391 = vmatpush.msra.mxu0 %v1667
    %2392 = vmatmul.f32.gmra.mxu0 %v2176
    %v2393 = vpop.f32.mrf.mxu0
    %v2394 = vadd.f32 %v2374, %v2393
    %2395 = vdwg.mxu0
    %2396 = vmatpush.msra.mxu0 %v1729
    %2397 = vmatpush.msra.mxu0 %v1727
    %2398 = vmatpush.msra.mxu0 %v1725
    %2399 = vmatpush.msra.mxu0 %v1723
    %2400 = vmatpush.msra.mxu0 %v1721
    %2401 = vmatpush.msra.mxu0 %v1719
    %2402 = vmatpush.msra.mxu0 %v1717
    %2403 = vmatpush.msra.mxu0 %v1715
    %2404 = vmatpush.msra.mxu0 %v1713
    %2405 = vmatpush.msra.mxu0 %v1711
    %2406 = vmatpush.msra.mxu0 %v1709
    %2407 = vmatpush.msra.mxu0 %v1707
    %2408 = vmatpush.msra.mxu0 %v1705
    %2409 = vmatpush.msra.mxu0 %v1703
    %2410 = vmatpush.msra.mxu0 %v1701
    %2411 = vmatpush.msra.mxu0 %v1699
    %2412 = vmatmul.f32.gmra.mxu0 %v2183
    %v2413 = vpop.f32.mrf.mxu0
    %v2414 = vadd.f32 %v2394, %v2413
    %2415 = vdwg.mxu0
    %2416 = vmatpush.msra.mxu0 %v1761
    %2417 = vmatpush.msra.mxu0 %v1759
    %2418 = vmatpush.msra.mxu0 %v1757
    %2419 = vmatpush.msra.mxu0 %v1755
    %2420 = vmatpush.msra.mxu0 %v1753
    %2421 = vmatpush.msra.mxu0 %v1751
    %2422 = vmatpush.msra.mxu0 %v1749
    %2423 = vmatpush.msra.mxu0 %v1747
    %2424 = vmatpush.msra.mxu0 %v1745
    %2425 = vmatpush.msra.mxu0 %v1743
    %2426 = vmatpush.msra.mxu0 %v1741
    %2427 = vmatpush.msra.mxu0 %v1739
    %2428 = vmatpush.msra.mxu0 %v1737
    %2429 = vmatpush.msra.mxu0 %v1735
    %2430 = vmatpush.msra.mxu0 %v1733
    %2431 = vmatpush.msra.mxu0 %v1731
    %2432 = vmatmul.f32.gmra.mxu0 %v2190
    %v2433 = vpop.f32.mrf.mxu0
    %v2434 = vadd.f32 %v2414, %v2433
    %2435 = vdwg.mxu0
    %2436 = vmatpush.msra.mxu0 %v1793
    %2437 = vmatpush.msra.mxu0 %v1791
    %2438 = vmatpush.msra.mxu0 %v1789
    %2439 = vmatpush.msra.mxu0 %v1787
    %2440 = vmatpush.msra.mxu0 %v1785
    %2441 = vmatpush.msra.mxu0 %v1783
    %2442 = vmatpush.msra.mxu0 %v1781
    %2443 = vmatpush.msra.mxu0 %v1779
    %2444 = vmatpush.msra.mxu0 %v1777
    %2445 = vmatpush.msra.mxu0 %v1775
    %2446 = vmatpush.msra.mxu0 %v1773
    %2447 = vmatpush.msra.mxu0 %v1771
    %2448 = vmatpush.msra.mxu0 %v1769
    %2449 = vmatpush.msra.mxu0 %v1767
    %2450 = vmatpush.msra.mxu0 %v1765
    %2451 = vmatpush.msra.mxu0 %v1763
    %2452 = vmatmul.f32.gmra.mxu0 %v2197
    %v2453 = vpop.f32.mrf.mxu0
    %v2454 = vadd.f32 %v2434, %v2453
    %2455 = vdwg.mxu0
    %2456 = vmatpush.msra.mxu0 %v1825
    %2457 = vmatpush.msra.mxu0 %v1823
    %2458 = vmatpush.msra.mxu0 %v1821
    %2459 = vmatpush.msra.mxu0 %v1819
    %2460 = vmatpush.msra.mxu0 %v1817
    %2461 = vmatpush.msra.mxu0 %v1815
    %2462 = vmatpush.msra.mxu0 %v1813
    %2463 = vmatpush.msra.mxu0 %v1811
    %2464 = vmatpush.msra.mxu0 %v1809
    %2465 = vmatpush.msra.mxu0 %v1807
    %2466 = vmatpush.msra.mxu0 %v1805
    %2467 = vmatpush.msra.mxu0 %v1803
    %2468 = vmatpush.msra.mxu0 %v1801
    %2469 = vmatpush.msra.mxu0 %v1799
    %2470 = vmatpush.msra.mxu0 %v1797
    %2471 = vmatpush.msra.mxu0 %v1795
    %2472 = vmatmul.f32.gmra.mxu0 %v2204
    %v2473 = vpop.f32.mrf.mxu0
    %v2474 = vadd.f32 %v2454, %v2473
    %2475 = vdwg.mxu0
    %2476 = vmatpush.msra.mxu0 %v1857
    %2477 = vmatpush.msra.mxu0 %v1855
    %2478 = vmatpush.msra.mxu0 %v1853
    %2479 = vmatpush.msra.mxu0 %v1851
    %2480 = vmatpush.msra.mxu0 %v1849
    %2481 = vmatpush.msra.mxu0 %v1847
    %2482 = vmatpush.msra.mxu0 %v1845
    %2483 = vmatpush.msra.mxu0 %v1843
    %2484 = vmatpush.msra.mxu0 %v1841
    %2485 = vmatpush.msra.mxu0 %v1839
    %2486 = vmatpush.msra.mxu0 %v1837
    %2487 = vmatpush.msra.mxu0 %v1835
    %2488 = vmatpush.msra.mxu0 %v1833
    %2489 = vmatpush.msra.mxu0 %v1831
    %2490 = vmatpush.msra.mxu0 %v1829
    %2491 = vmatpush.msra.mxu0 %v1827
    %2492 = vmatmul.f32.gmra.mxu0 %v2211
    %v2493 = vpop.f32.mrf.mxu0
    %v2494 = vadd.f32 %v2474, %v2493
    %2495 = vdwg.mxu0
    %2496 = vmatpush.msra.mxu0 %v1889
    %2497 = vmatpush.msra.mxu0 %v1887
    %2498 = vmatpush.msra.mxu0 %v1885
    %2499 = vmatpush.msra.mxu0 %v1883
    %2500 = vmatpush.msra.mxu0 %v1881
    %2501 = vmatpush.msra.mxu0 %v1879
    %2502 = vmatpush.msra.mxu0 %v1877
    %2503 = vmatpush.msra.mxu0 %v1875
    %2504 = vmatpush.msra.mxu0 %v1873
    %2505 = vmatpush.msra.mxu0 %v1871
    %2506 = vmatpush.msra.mxu0 %v1869
    %2507 = vmatpush.msra.mxu0 %v1867
    %2508 = vmatpush.msra.mxu0 %v1865
    %2509 = vmatpush.msra.mxu0 %v1863
    %2510 = vmatpush.msra.mxu0 %v1861
    %2511 = vmatpush.msra.mxu0 %v1859
    %2512 = vmatmul.f32.gmra.mxu0 %v2218
    %v2513 = vpop.f32.mrf.mxu0
    %v2514 = vadd.f32 %v2494, %v2513
    %2515 = vdwg.mxu0
    %2516 = vmatpush.msra.mxu0 %v1921
    %2517 = vmatpush.msra.mxu0 %v1919
    %2518 = vmatpush.msra.mxu0 %v1917
    %2519 = vmatpush.msra.mxu0 %v1915
    %2520 = vmatpush.msra.mxu0 %v1913
    %2521 = vmatpush.msra.mxu0 %v1911
    %2522 = vmatpush.msra.mxu0 %v1909
    %2523 = vmatpush.msra.mxu0 %v1907
    %2524 = vmatpush.msra.mxu0 %v1905
    %2525 = vmatpush.msra.mxu0 %v1903
    %2526 = vmatpush.msra.mxu0 %v1901
    %2527 = vmatpush.msra.mxu0 %v1899
    %2528 = vmatpush.msra.mxu0 %v1897
    %2529 = vmatpush.msra.mxu0 %v1895
    %2530 = vmatpush.msra.mxu0 %v1893
    %2531 = vmatpush.msra.mxu0 %v1891
    %2532 = vmatmul.f32.gmra.mxu0 %v2225
    %v2533 = vpop.f32.mrf.mxu0
    %v2534 = vadd.f32 %v2514, %v2533
    %2535 = vdwg.mxu0
    %2536 = vmatpush.msra.mxu0 %v1953
    %2537 = vmatpush.msra.mxu0 %v1951
    %2538 = vmatpush.msra.mxu0 %v1949
    %2539 = vmatpush.msra.mxu0 %v1947
    %2540 = vmatpush.msra.mxu0 %v1945
    %2541 = vmatpush.msra.mxu0 %v1943
    %2542 = vmatpush.msra.mxu0 %v1941
    %2543 = vmatpush.msra.mxu0 %v1939
    %2544 = vmatpush.msra.mxu0 %v1937
    %2545 = vmatpush.msra.mxu0 %v1935
    %2546 = vmatpush.msra.mxu0 %v1933
    %2547 = vmatpush.msra.mxu0 %v1931
    %2548 = vmatpush.msra.mxu0 %v1929
    %2549 = vmatpush.msra.mxu0 %v1927
    %2550 = vmatpush.msra.mxu0 %v1925
    %2551 = vmatpush.msra.mxu0 %v1923
    %2552 = vmatmul.f32.gmra.mxu0 %v2232
    %v2553 = vpop.f32.mrf.mxu0
    %v2554 = vadd.f32 %v2534, %v2553
    %2555 = vdwg.mxu0
    %2556 = vmatpush.msra.mxu0 %v1985
    %2557 = vmatpush.msra.mxu0 %v1983
    %2558 = vmatpush.msra.mxu0 %v1981
    %2559 = vmatpush.msra.mxu0 %v1979
    %2560 = vmatpush.msra.mxu0 %v1977
    %2561 = vmatpush.msra.mxu0 %v1975
    %2562 = vmatpush.msra.mxu0 %v1973
    %2563 = vmatpush.msra.mxu0 %v1971
    %2564 = vmatpush.msra.mxu0 %v1969
    %2565 = vmatpush.msra.mxu0 %v1967
    %2566 = vmatpush.msra.mxu0 %v1965
    %2567 = vmatpush.msra.mxu0 %v1963
    %2568 = vmatpush.msra.mxu0 %v1961
    %2569 = vmatpush.msra.mxu0 %v1959
    %2570 = vmatpush.msra.mxu0 %v1957
    %2571 = vmatpush.msra.mxu0 %v1955
    %2572 = vmatmul.f32.gmra.mxu0 %v2239
    %v2573 = vpop.f32.mrf.mxu0
    %v2574 = vadd.f32 %v2554, %v2573
    %2575 = vdwg.mxu0
    %2576 = vmatpush.msra.mxu0 %v1506
    %2577 = vmatpush.msra.mxu0 %v1504
    %2578 = vmatpush.msra.mxu0 %v1502
    %2579 = vmatpush.msra.mxu0 %v1500
    %2580 = vmatpush.msra.mxu0 %v1498
    %2581 = vmatpush.msra.mxu0 %v1496
    %2582 = vmatpush.msra.mxu0 %v1494
    %2583 = vmatpush.msra.mxu0 %v1492
    %2584 = vmatpush.msra.mxu0 %v1490
    %2585 = vmatpush.msra.mxu0 %v1488
    %2586 = vmatpush.msra.mxu0 %v1486
    %2587 = vmatpush.msra.mxu0 %v1484
    %2588 = vmatpush.msra.mxu0 %v1482
    %2589 = vmatpush.msra.mxu0 %v1480
    %2590 = vmatpush.msra.mxu0 %v1478
    %2591 = vmatpush.msra.mxu0 %v1476
    %2592 = vmatmul.f32.gmra.mxu0 %v2134
    %v2593 = vpop.f32.mrf.mxu0
    %v2594 = vadd.f32 %v1990, %v2593
    %2595 = vdwg.mxu0
    %2596 = vmatpush.msra.mxu0 %v1538
    %2597 = vmatpush.msra.mxu0 %v1536
    %2598 = vmatpush.msra.mxu0 %v1534
    %2599 = vmatpush.msra.mxu0 %v1532
    %2600 = vmatpush.msra.mxu0 %v1530
    %2601 = vmatpush.msra.mxu0 %v1528
    %2602 = vmatpush.msra.mxu0 %v1526
    %2603 = vmatpush.msra.mxu0 %v1524
    %2604 = vmatpush.msra.mxu0 %v1522
    %2605 = vmatpush.msra.mxu0 %v1520
    %2606 = vmatpush.msra.mxu0 %v1518
    %2607 = vmatpush.msra.mxu0 %v1516
    %2608 = vmatpush.msra.mxu0 %v1514
    %2609 = vmatpush.msra.mxu0 %v1512
    %2610 = vmatpush.msra.mxu0 %v1510
    %2611 = vmatpush.msra.mxu0 %v1508
    %2612 = vmatmul.f32.gmra.mxu0 %v2141
    %v2613 = vpop.f32.mrf.mxu0
    %v2614 = vadd.f32 %v2594, %v2613
    %2615 = vdwg.mxu0
    %2616 = vmatpush.msra.mxu0 %v1570
    %2617 = vmatpush.msra.mxu0 %v1568
    %2618 = vmatpush.msra.mxu0 %v1566
    %2619 = vmatpush.msra.mxu0 %v1564
    %2620 = vmatpush.msra.mxu0 %v1562
    %2621 = vmatpush.msra.mxu0 %v1560
    %2622 = vmatpush.msra.mxu0 %v1558
    %2623 = vmatpush.msra.mxu0 %v1556
    %2624 = vmatpush.msra.mxu0 %v1554
    %2625 = vmatpush.msra.mxu0 %v1552
    %2626 = vmatpush.msra.mxu0 %v1550
    %2627 = vmatpush.msra.mxu0 %v1548
    %2628 = vmatpush.msra.mxu0 %v1546
    %2629 = vmatpush.msra.mxu0 %v1544
    %2630 = vmatpush.msra.mxu0 %v1542
    %2631 = vmatpush.msra.mxu0 %v1540
    %2632 = vmatmul.f32.gmra.mxu0 %v2148
    %v2633 = vpop.f32.mrf.mxu0
    %v2634 = vadd.f32 %v2614, %v2633
    %2635 = vdwg.mxu0
    %2636 = vmatpush.msra.mxu0 %v1602
    %2637 = vmatpush.msra.mxu0 %v1600
    %2638 = vmatpush.msra.mxu0 %v1598
    %2639 = vmatpush.msra.mxu0 %v1596
    %2640 = vmatpush.msra.mxu0 %v1594
    %2641 = vmatpush.msra.mxu0 %v1592
    %2642 = vmatpush.msra.mxu0 %v1590
    %2643 = vmatpush.msra.mxu0 %v1588
    %2644 = vmatpush.msra.mxu0 %v1586
    %2645 = vmatpush.msra.mxu0 %v1584
    %2646 = vmatpush.msra.mxu0 %v1582
    %2647 = vmatpush.msra.mxu0 %v1580
    %2648 = vmatpush.msra.mxu0 %v1578
    %2649 = vmatpush.msra.mxu0 %v1576
    %2650 = vmatpush.msra.mxu0 %v1574
    %2651 = vmatpush.msra.mxu0 %v1572
    %2652 = vmatmul.f32.gmra.mxu0 %v2155
    %v2653 = vpop.f32.mrf.mxu0
    %v2654 = vadd.f32 %v2634, %v2653
    %2655 = vdwg.mxu0
    %2656 = vmatpush.msra.mxu0 %v1634
    %2657 = vmatpush.msra.mxu0 %v1632
    %2658 = vmatpush.msra.mxu0 %v1630
    %2659 = vmatpush.msra.mxu0 %v1628
    %2660 = vmatpush.msra.mxu0 %v1626
    %2661 = vmatpush.msra.mxu0 %v1624
    %2662 = vmatpush.msra.mxu0 %v1622
    %2663 = vmatpush.msra.mxu0 %v1620
    %2664 = vmatpush.msra.mxu0 %v1618
    %2665 = vmatpush.msra.mxu0 %v1616
    %2666 = vmatpush.msra.mxu0 %v1614
    %2667 = vmatpush.msra.mxu0 %v1612
    %2668 = vmatpush.msra.mxu0 %v1610
    %2669 = vmatpush.msra.mxu0 %v1608
    %2670 = vmatpush.msra.mxu0 %v1606
    %2671 = vmatpush.msra.mxu0 %v1604
    %2672 = vmatmul.f32.gmra.mxu0 %v2162
    %v2673 = vpop.f32.mrf.mxu0
    %v2674 = vadd.f32 %v2654, %v2673
    %2675 = vdwg.mxu0
    %2676 = vmatpush.msra.mxu0 %v1666
    %2677 = vmatpush.msra.mxu0 %v1664
    %2678 = vmatpush.msra.mxu0 %v1662
    %2679 = vmatpush.msra.mxu0 %v1660
    %2680 = vmatpush.msra.mxu0 %v1658
    %2681 = vmatpush.msra.mxu0 %v1656
    %2682 = vmatpush.msra.mxu0 %v1654
    %2683 = vmatpush.msra.mxu0 %v1652
    %2684 = vmatpush.msra.mxu0 %v1650
    %2685 = vmatpush.msra.mxu0 %v1648
    %2686 = vmatpush.msra.mxu0 %v1646
    %2687 = vmatpush.msra.mxu0 %v1644
    %2688 = vmatpush.msra.mxu0 %v1642
    %2689 = vmatpush.msra.mxu0 %v1640
    %2690 = vmatpush.msra.mxu0 %v1638
    %2691 = vmatpush.msra.mxu0 %v1636
    %2692 = vmatmul.f32.gmra.mxu0 %v2169
    %v2693 = vpop.f32.mrf.mxu0
    %v2694 = vadd.f32 %v2674, %v2693
    %2695 = vdwg.mxu0
    %2696 = vmatpush.msra.mxu0 %v1698
    %2697 = vmatpush.msra.mxu0 %v1696
    %2698 = vmatpush.msra.mxu0 %v1694
    %2699 = vmatpush.msra.mxu0 %v1692
    %2700 = vmatpush.msra.mxu0 %v1690
    %2701 = vmatpush.msra.mxu0 %v1688
    %2702 = vmatpush.msra.mxu0 %v1686
    %2703 = vmatpush.msra.mxu0 %v1684
    %2704 = vmatpush.msra.mxu0 %v1682
    %2705 = vmatpush.msra.mxu0 %v1680
    %2706 = vmatpush.msra.mxu0 %v1678
    %2707 = vmatpush.msra.mxu0 %v1676
    %2708 = vmatpush.msra.mxu0 %v1674
    %2709 = vmatpush.msra.mxu0 %v1672
    %2710 = vmatpush.msra.mxu0 %v1670
    %2711 = vmatpush.msra.mxu0 %v1668
    %2712 = vmatmul.f32.gmra.mxu0 %v2176
    %v2713 = vpop.f32.mrf.mxu0
    %v2714 = vadd.f32 %v2694, %v2713
    %2715 = vdwg.mxu0
    %2716 = vmatpush.msra.mxu0 %v1730
    %2717 = vmatpush.msra.mxu0 %v1728
    %2718 = vmatpush.msra.mxu0 %v1726
    %2719 = vmatpush.msra.mxu0 %v1724
    %2720 = vmatpush.msra.mxu0 %v1722
    %2721 = vmatpush.msra.mxu0 %v1720
    %2722 = vmatpush.msra.mxu0 %v1718
    %2723 = vmatpush.msra.mxu0 %v1716
    %2724 = vmatpush.msra.mxu0 %v1714
    %2725 = vmatpush.msra.mxu0 %v1712
    %2726 = vmatpush.msra.mxu0 %v1710
    %2727 = vmatpush.msra.mxu0 %v1708
    %2728 = vmatpush.msra.mxu0 %v1706
    %2729 = vmatpush.msra.mxu0 %v1704
    %2730 = vmatpush.msra.mxu0 %v1702
    %2731 = vmatpush.msra.mxu0 %v1700
    %2732 = vmatmul.f32.gmra.mxu0 %v2183
    %v2733 = vpop.f32.mrf.mxu0
    %v2734 = vadd.f32 %v2714, %v2733
    %2735 = vdwg.mxu0
    %2736 = vmatpush.msra.mxu0 %v1762
    %2737 = vmatpush.msra.mxu0 %v1760
    %2738 = vmatpush.msra.mxu0 %v1758
    %2739 = vmatpush.msra.mxu0 %v1756
    %2740 = vmatpush.msra.mxu0 %v1754
    %2741 = vmatpush.msra.mxu0 %v1752
    %2742 = vmatpush.msra.mxu0 %v1750
    %2743 = vmatpush.msra.mxu0 %v1748
    %2744 = vmatpush.msra.mxu0 %v1746
    %2745 = vmatpush.msra.mxu0 %v1744
    %2746 = vmatpush.msra.mxu0 %v1742
    %2747 = vmatpush.msra.mxu0 %v1740
    %2748 = vmatpush.msra.mxu0 %v1738
    %2749 = vmatpush.msra.mxu0 %v1736
    %2750 = vmatpush.msra.mxu0 %v1734
    %2751 = vmatpush.msra.mxu0 %v1732
    %2752 = vmatmul.f32.gmra.mxu0 %v2190
    %v2753 = vpop.f32.mrf.mxu0
    %v2754 = vadd.f32 %v2734, %v2753
    %2755 = vdwg.mxu0
    %2756 = vmatpush.msra.mxu0 %v1794
    %2757 = vmatpush.msra.mxu0 %v1792
    %2758 = vmatpush.msra.mxu0 %v1790
    %2759 = vmatpush.msra.mxu0 %v1788
    %2760 = vmatpush.msra.mxu0 %v1786
    %2761 = vmatpush.msra.mxu0 %v1784
    %2762 = vmatpush.msra.mxu0 %v1782
    %2763 = vmatpush.msra.mxu0 %v1780
    %2764 = vmatpush.msra.mxu0 %v1778
    %2765 = vmatpush.msra.mxu0 %v1776
    %2766 = vmatpush.msra.mxu0 %v1774
    %2767 = vmatpush.msra.mxu0 %v1772
    %2768 = vmatpush.msra.mxu0 %v1770
    %2769 = vmatpush.msra.mxu0 %v1768
    %2770 = vmatpush.msra.mxu0 %v1766
    %2771 = vmatpush.msra.mxu0 %v1764
    %2772 = vmatmul.f32.gmra.mxu0 %v2197
    %v2773 = vpop.f32.mrf.mxu0
    %v2774 = vadd.f32 %v2754, %v2773
    %2775 = vdwg.mxu0
    %2776 = vmatpush.msra.mxu0 %v1826
    %2777 = vmatpush.msra.mxu0 %v1824
    %2778 = vmatpush.msra.mxu0 %v1822
    %2779 = vmatpush.msra.mxu0 %v1820
    %2780 = vmatpush.msra.mxu0 %v1818
    %2781 = vmatpush.msra.mxu0 %v1816
    %2782 = vmatpush.msra.mxu0 %v1814
    %2783 = vmatpush.msra.mxu0 %v1812
    %2784 = vmatpush.msra.mxu0 %v1810
    %2785 = vmatpush.msra.mxu0 %v1808
    %2786 = vmatpush.msra.mxu0 %v1806
    %2787 = vmatpush.msra.mxu0 %v1804
    %2788 = vmatpush.msra.mxu0 %v1802
    %2789 = vmatpush.msra.mxu0 %v1800
    %2790 = vmatpush.msra.mxu0 %v1798
    %2791 = vmatpush.msra.mxu0 %v1796
    %2792 = vmatmul.f32.gmra.mxu0 %v2204
    %v2793 = vpop.f32.mrf.mxu0
    %v2794 = vadd.f32 %v2774, %v2793
    %2795 = vdwg.mxu0
    %2796 = vmatpush.msra.mxu0 %v1858
    %2797 = vmatpush.msra.mxu0 %v1856
    %2798 = vmatpush.msra.mxu0 %v1854
    %2799 = vmatpush.msra.mxu0 %v1852
    %2800 = vmatpush.msra.mxu0 %v1850
    %2801 = vmatpush.msra.mxu0 %v1848
    %2802 = vmatpush.msra.mxu0 %v1846
    %2803 = vmatpush.msra.mxu0 %v1844
    %2804 = vmatpush.msra.mxu0 %v1842
    %2805 = vmatpush.msra.mxu0 %v1840
    %2806 = vmatpush.msra.mxu0 %v1838
    %2807 = vmatpush.msra.mxu0 %v1836
    %2808 = vmatpush.msra.mxu0 %v1834
    %2809 = vmatpush.msra.mxu0 %v1832
    %2810 = vmatpush.msra.mxu0 %v1830
    %2811 = vmatpush.msra.mxu0 %v1828
    %2812 = vmatmul.f32.gmra.mxu0 %v2211
    %v2813 = vpop.f32.mrf.mxu0
    %v2814 = vadd.f32 %v2794, %v2813
    %2815 = vdwg.mxu0
    %2816 = vmatpush.msra.mxu0 %v1890
    %2817 = vmatpush.msra.mxu0 %v1888
    %2818 = vmatpush.msra.mxu0 %v1886
    %2819 = vmatpush.msra.mxu0 %v1884
    %2820 = vmatpush.msra.mxu0 %v1882
    %2821 = vmatpush.msra.mxu0 %v1880
    %2822 = vmatpush.msra.mxu0 %v1878
    %2823 = vmatpush.msra.mxu0 %v1876
    %2824 = vmatpush.msra.mxu0 %v1874
    %2825 = vmatpush.msra.mxu0 %v1872
    %2826 = vmatpush.msra.mxu0 %v1870
    %2827 = vmatpush.msra.mxu0 %v1868
    %2828 = vmatpush.msra.mxu0 %v1866
    %2829 = vmatpush.msra.mxu0 %v1864
    %2830 = vmatpush.msra.mxu0 %v1862
    %2831 = vmatpush.msra.mxu0 %v1860
    %2832 = vmatmul.f32.gmra.mxu0 %v2218
    %v2833 = vpop.f32.mrf.mxu0
    %v2834 = vadd.f32 %v2814, %v2833
    %2835 = vdwg.mxu0
    %2836 = vmatpush.msra.mxu0 %v1922
    %2837 = vmatpush.msra.mxu0 %v1920
    %2838 = vmatpush.msra.mxu0 %v1918
    %2839 = vmatpush.msra.mxu0 %v1916
    %2840 = vmatpush.msra.mxu0 %v1914
    %2841 = vmatpush.msra.mxu0 %v1912
    %2842 = vmatpush.msra.mxu0 %v1910
    %2843 = vmatpush.msra.mxu0 %v1908
    %2844 = vmatpush.msra.mxu0 %v1906
    %2845 = vmatpush.msra.mxu0 %v1904
    %2846 = vmatpush.msra.mxu0 %v1902
    %2847 = vmatpush.msra.mxu0 %v1900
    %2848 = vmatpush.msra.mxu0 %v1898
    %2849 = vmatpush.msra.mxu0 %v1896
    %2850 = vmatpush.msra.mxu0 %v1894
    %2851 = vmatpush.msra.mxu0 %v1892
    %2852 = vmatmul.f32.gmra.mxu0 %v2225
    %v2853 = vpop.f32.mrf.mxu0
    %v2854 = vadd.f32 %v2834, %v2853
    %2855 = vdwg.mxu0
    %2856 = vmatpush.msra.mxu0 %v1954
    %2857 = vmatpush.msra.mxu0 %v1952
    %2858 = vmatpush.msra.mxu0 %v1950
    %2859 = vmatpush.msra.mxu0 %v1948
    %2860 = vmatpush.msra.mxu0 %v1946
    %2861 = vmatpush.msra.mxu0 %v1944
    %2862 = vmatpush.msra.mxu0 %v1942
    %2863 = vmatpush.msra.mxu0 %v1940
    %2864 = vmatpush.msra.mxu0 %v1938
    %2865 = vmatpush.msra.mxu0 %v1936
    %2866 = vmatpush.msra.mxu0 %v1934
    %2867 = vmatpush.msra.mxu0 %v1932
    %2868 = vmatpush.msra.mxu0 %v1930
    %2869 = vmatpush.msra.mxu0 %v1928
    %2870 = vmatpush.msra.mxu0 %v1926
    %2871 = vmatpush.msra.mxu0 %v1924
    %2872 = vmatmul.f32.gmra.mxu0 %v2232
    %v2873 = vpop.f32.mrf.mxu0
    %v2874 = vadd.f32 %v2854, %v2873
    %2875 = vdwg.mxu0
    %2876 = vmatpush.msra.mxu0 %v1986
    %2877 = vmatpush.msra.mxu0 %v1984
    %2878 = vmatpush.msra.mxu0 %v1982
    %2879 = vmatpush.msra.mxu0 %v1980
    %2880 = vmatpush.msra.mxu0 %v1978
    %2881 = vmatpush.msra.mxu0 %v1976
    %2882 = vmatpush.msra.mxu0 %v1974
    %2883 = vmatpush.msra.mxu0 %v1972
    %2884 = vmatpush.msra.mxu0 %v1970
    %2885 = vmatpush.msra.mxu0 %v1968
    %2886 = vmatpush.msra.mxu0 %v1966
    %2887 = vmatpush.msra.mxu0 %v1964
    %2888 = vmatpush.msra.mxu0 %v1962
    %2889 = vmatpush.msra.mxu0 %v1960
    %2890 = vmatpush.msra.mxu0 %v1958
    %2891 = vmatpush.msra.mxu0 %v1956
    %2892 = vmatmul.f32.gmra.mxu0 %v2239
    %v2893 = vpop.f32.mrf.mxu0
    %v2894 = vadd.f32 %v2874, %v2893
    %2895 = vdwg.mxu0
    %v2896 = vmul.f32 %v2574, %v2574
    %v2897 = vmul.f32 %v2894, %v2894
    %v2898 = vadd.f32 %v2896, %v2897
    %2899 = vadd.xlane.f32.xlu0 %v2898
    %v2900 = vpop.xlane.xlu0 %2899
    %v2901 = vrsqrt.pop %v2900
    %v2902 = vmul.f32 %v2901, %v2900
    %v2903 = vmul.f32 %v2902, %v2901
    %v2904 = vmul.f32 0.5, %v2903
    %v2905 = vsub.f32 1.5, %v2904
    %v2906 = vmul.f32 %v2901, %v2905
    %vm2907 = vweird.f32 %v2900
    %vm2908 = vweird.f32 %v2901
    %vm2909 = vmor %vm2907, %vm2908
    %v2910 = vsel %vm2909, %v2901, %v2906
    %v2911 = vmul.f32 %v2574, %v2910
    %v2912 = vmul.f32 %v2894, %v2910
    %2913 = vst [vmem:[#allocation8] sm:$0xff] %v2911
    %2914 = vst [vmem:[#allocation8 + $0x8] sm:$0xff] %v2912
    // Predicated region
    $region26: #{tpu_custom_call.1} parent=1 // pred_check
      _
    $region27: #{tpu_custom_call.1} parent=1 // pred_check_branch
      %2916 = sbr.rel (0) target = $region29
    $region28: #{tpu_custom_call.1} parent=1 // pred_region
      %2918 = vsyncadd [#allocation4], 0
      %s2920 = sshll.u32 [#allocation8], 4
      %s2921 = int_to_ptr.vmem [resolvable:$true] %s2920
      %s2922 = sshll.u32 %s3, 4
      %s2923 = int_to_ptr.hbm [resolvable:$true] %s2922
      %2925 = dma.vmem_to_hbm [thread:$0]  %s2921, 256, %s2923, [#allocation4]
    $region29: #{tpu_custom_call.1} parent=1 // pred_fallthru
      _
    // Predicated region
    $region30: #{tpu_custom_call.1} parent=1 // pred_check
      _
    $region31: #{tpu_custom_call.1} parent=1 // pred_check_branch
      %2927 = sbr.rel (0) target = $region33
    $region32: #{tpu_custom_call.1} parent=1 // pred_region
      %2929 = dma.done [#allocation4], 256
    $region33: #{tpu_custom_call.1} parent=1 // pred_fallthru
      _
    %2930 = vsyncpa [#allocation3], 1
    %2931 = vsyncpa [#allocation6], 1
    %2932 = vsyncpa [#allocation4], 1

</llo_original>
